<compile_context>
chip_gen: v6e
topology: v6e:2x2x1
jax: 0.10.0
libtpu: 0.0.40
codegen_flags: <defaults>
</compile_context>

<pallas_src>
import functools

import jax
import jax.numpy as jnp
from jax.experimental import pallas as pl
from jax.experimental.pallas import tpu as pltpu


def _round_up(x, m):
    return ((x + m - 1) // m) * m


# ---------------------------------------------------------------------------
# Generic tiled matmul-with-bias kernel:  O = A @ W + b
# Used for both the hoisted input projection and the output (vocab) projection.
# ---------------------------------------------------------------------------
def _matmul_bias_kernel(a_ref, w_ref, b_ref, o_ref, acc_ref):
    k = pl.program_id(2)

    @pl.when(k == 0)
    def _():
        acc_ref[...] = jnp.zeros_like(acc_ref)

    acc_ref[...] += jnp.dot(a_ref[...], w_ref[...],
                            preferred_element_type=jnp.float32)

    @pl.when(k == pl.num_programs(2) - 1)
    def _():
        o_ref[...] = (acc_ref[...] + b_ref[...]).astype(o_ref.dtype)


def matmul_bias(a, w, bias, *, bm=256, bn=512, bk=512):
    """(M, K) @ (K, N) + bias(N,), tiled over M/N/K, megacore-parallel on M/N."""
    M, K = a.shape
    _, N = w.shape
    bm = min(bm, _round_up(M, 8))
    bn = min(bn, _round_up(N, 128))
    bk = min(bk, _round_up(K, 128))
    Mp, Kp, Np = _round_up(M, bm), _round_up(K, bk), _round_up(N, bn)

    a_p = jnp.pad(a, ((0, Mp - M), (0, Kp - K)))
    w_p = jnp.pad(w, ((0, Kp - K), (0, Np - N)))
    b_p = jnp.pad(bias.reshape(1, -1), ((0, 0), (0, Np - N)))

    out = pl.pallas_call(
        _matmul_bias_kernel,
        out_shape=jax.ShapeDtypeStruct((Mp, Np), jnp.float32),
        grid_spec=pltpu.PrefetchScalarGridSpec(
            num_scalar_prefetch=0,
            grid=(Mp // bm, Np // bn, Kp // bk),
            in_specs=[
                pl.BlockSpec((bm, bk), lambda i, j, k: (i, k)),
                pl.BlockSpec((bk, bn), lambda i, j, k: (k, j)),
                pl.BlockSpec((1, bn), lambda i, j, k: (0, j)),
            ],
            out_specs=pl.BlockSpec((bm, bn), lambda i, j, k: (i, j)),
            scratch_shapes=[pltpu.VMEM((bm, bn), jnp.float32)],
        ),
        compiler_params=pltpu.CompilerParams(
            dimension_semantics=("parallel", "parallel", "arbitrary"),
        ),
    )(a_p, w_p, b_p)
    return out[:M, :N]


# ---------------------------------------------------------------------------
# Recurrent kernel: one grid step == TT consecutive time steps.
# ---------------------------------------------------------------------------
def _rnn_recurrent_kernel(pre_ref, whh_ref, hs_ref, hlast_ref, h_scratch,
                          *, tt, seq_len):
    """
    pre_ref   : (TT, Bp, H)  precomputed  x_t @ W_ih^T + b_ih + b_hh
    whh_ref   : (H, H)       W_hh^T (VMEM-resident across grid steps)
    hs_ref    : (TT, Bp, H)  hidden states for these TT time steps
    hlast_ref : (Bp, H)      final hidden state (written once, last grid step)
    h_scratch : (Bp, H)      VMEM carry of the hidden state across grid steps
    """
    chunk = pl.program_id(0)

    @pl.when(chunk == 0)
    def _():
        h_scratch[...] = jnp.zeros_like(h_scratch)

    whh = whh_ref[...]                     # (H, H), read once per chunk
    h = h_scratch[...]                     # (Bp, H)
    needs_mask = (seq_len % tt) != 0       # only if T was padded to a TT multiple

    for i in range(tt):                    # small static unroll (true recurrence)
        h_new = jnp.tanh(pre_ref[i] +
                         jnp.dot(h, whh, preferred_element_type=jnp.float32))
        if needs_mask:
            valid = (chunk * tt + i) < seq_len
            h_new = jnp.where(valid, h_new, h)   # freeze carry on padded steps
        hs_ref[i] = h_new                  # lane-dense store (H multiple of 128)
        h = h_new

    h_scratch[...] = h

    @pl.when(chunk == pl.num_programs(0) - 1)
    def _():
        hlast_ref[...] = h                 # written back only once


# ---------------------------------------------------------------------------
# Forward wrapper
# ---------------------------------------------------------------------------
def rnn_lm_forward(input_ids, params, *, time_chunk=16):
    """input_ids: (B, T) int32.  Returns (logits (B,T,V), hidden (1,B,H))."""
    emb = params["embedding"]          # (V, E)
    wih_t = params["wih_t"]            # (E, H)
    whh_t = params["whh_t"]            # (H, H)
    b = params["b"]                    # (H,)   = b_ih + b_hh
    wfc_t = params["wfc_t"]            # (H, V)
    bfc = params["bfc"]                # (V,)

    B, T = input_ids.shape
    E, H = wih_t.shape
    V = wfc_t.shape[1]

    TT = min(time_chunk, T)            # time steps per grid iteration
    Tp = _round_up(T, TT)
    Bp = _round_up(B, 8)               # pad batch: unmasked sublanes / MXU rows

    # Embedding gather + time-major layout: plain-JAX glue (XLA gather is the
    # right tool here; a Pallas row-gather would be 1 row per grid step).
    embeds = jnp.take(emb, input_ids, axis=0)            # (B, T, E)
    x_tbe = jnp.transpose(embeds, (1, 0, 2))             # (T, B, E)
    x_tbe = jnp.pad(x_tbe, ((0, Tp - T), (0, Bp - B), (0, 0)))

    # (1) Hoisted input projection for ALL time steps: one batched matmul.
    pre = matmul_bias(x_tbe.reshape(Tp * Bp, E), wih_t, b).reshape(Tp, Bp, H)

    # (2) Strictly sequential recurrence, TT steps per grid point.
    hs, h_last = pl.pallas_call(
        functools.partial(_rnn_recurrent_kernel, tt=TT, seq_len=T),
        out_shape=(
            jax.ShapeDtypeStruct((Tp, Bp, H), jnp.float32),
            jax.ShapeDtypeStruct((Bp, H), jnp.float32),
        ),
        grid_spec=pltpu.PrefetchScalarGridSpec(
            num_scalar_prefetch=0,
            grid=(Tp // TT,),
            in_specs=[
                pl.BlockSpec((TT, Bp, H), lambda c: (c, 0, 0)),
                pl.BlockSpec((H, H), lambda c: (0, 0)),
            ],
            out_specs=[
                pl.BlockSpec((TT, Bp, H), lambda c: (c, 0, 0)),
                pl.BlockSpec((Bp, H), lambda c: (0, 0)),
            ],
            scratch_shapes=[pltpu.VMEM((Bp, H), jnp.float32)],
        ),
        compiler_params=pltpu.CompilerParams(
            dimension_semantics=("arbitrary",),   # recurrence: single-core, in order
        ),
    )(pre, whh_t)

    # (3) Hoisted output projection as one big batched matmul (V tiled inside).
    logits = matmul_bias(hs.reshape(Tp * Bp, H), wfc_t, bfc)     # (Tp*Bp, V)
    logits = logits.reshape(Tp, Bp, V)[:T, :B]
    logits = jnp.transpose(logits, (1, 0, 2))                    # (B, T, V)

    hidden = h_last[:B][None]                                    # (1, B, H)
    return logits, hidden


# ---------------------------------------------------------------------------
# Params / reference
# ---------------------------------------------------------------------------
def init_params(key, vocab_size, embed_dim, hidden_dim, pad_token_id=0):
    ks = jax.random.split(key, 7)
    scale = 0.05
    emb = scale * jax.random.normal(ks[0], (vocab_size, embed_dim), jnp.float32)
    emb = emb.at[pad_token_id].set(0.0)                # padding_idx row is zero
    w_ih = scale * jax.random.normal(ks[1], (hidden_dim, embed_dim), jnp.float32)
    w_hh = scale * jax.random.normal(ks[2], (hidden_dim, hidden_dim), jnp.float32)
    b_ih = scale * jax.random.normal(ks[3], (hidden_dim,), jnp.float32)
    b_hh = scale * jax.random.normal(ks[4], (hidden_dim,), jnp.float32)
    w_fc = scale * jax.random.normal(ks[5], (vocab_size, hidden_dim), jnp.float32)
    b_fc = scale * jax.random.normal(ks[6], (vocab_size,), jnp.float32)
    return {
        "embedding": emb,
        "wih_t": w_ih.T,                               # (E, H)
        "whh_t": w_hh.T,                               # (H, H)
        "b": b_ih + b_hh,                              # (H,)
        "wfc_t": w_fc.T,                               # (H, V)
        "bfc": b_fc,                                   # (V,)
    }


def reference_forward(input_ids, params):
    """Pure-JAX reference of the same math (sanity check)."""
    embeds = jnp.take(params["embedding"], input_ids, axis=0)   # (B, T, E)
    B, T, E = embeds.shape
    H = params["whh_t"].shape[0]

    def step(h, x_t):
        h_new = jnp.tanh(x_t @ params["wih_t"] + h @ params["whh_t"] + params["b"])
        return h_new, h_new

    h0 = jnp.zeros((B, H), jnp.float32)
    h_last, hs = jax.lax.scan(step, h0, jnp.transpose(embeds, (1, 0, 2)))
    out = jnp.transpose(hs, (1, 0, 2))                           # (B, T, H)
    logits = out @ params["wfc_t"] + params["bfc"]
    return logits, h_last[None]


if __name__ == "__main__":
    VOCAB, EMBED, HIDDEN = 256, 128, 256
    B, T = 2, 8

    key = jax.random.PRNGKey(0)
    k_param, k_ids = jax.random.split(key)
    params = init_params(k_param, VOCAB, EMBED, HIDDEN, pad_token_id=0)
    input_ids = jax.random.randint(k_ids, (B, T), 0, VOCAB, dtype=jnp.int32)

    logits, hidden = jax.jit(rnn_lm_forward)(input_ids, params)
    jax.block_until_ready((logits, hidden))

    ref_logits, ref_hidden = reference_forward(input_ids, params)
    assert logits.shape == (B, T, VOCAB)
    assert hidden.shape == (1, B, HIDDEN)
    assert jnp.allclose(logits, ref_logits, rtol=1e-4, atol=1e-4)
    assert jnp.allclose(hidden, ref_hidden, rtol=1e-4, atol=1e-4)

    print("KERNEL_OK")
</pallas_src>

<mosaic_0001>
module attributes {stable_mosaic.version = 11 : i64} {
  func.func @_matmul_bias_kernel(%arg0: i32, %arg1: i32, %arg2: i32, %arg3: memref<64x128xf32, #tpu.memory_space<vmem>>, %arg4: memref<128x256xf32, #tpu.memory_space<vmem>>, %arg5: memref<1x256xf32, #tpu.memory_space<vmem>>, %arg6: memref<64x256xf32, #tpu.memory_space<vmem>>, %arg7: memref<64x256xf32, #tpu.memory_space<vmem>>) attributes {dimension_semantics = [#tpu.dimension_semantics<parallel>, #tpu.dimension_semantics<parallel>, #tpu.dimension_semantics<arbitrary>], iteration_bounds = array<i64: 1, 1, 1>, scalar_prefetch = 0 : i64, scratch_operands = 1 : i64, tpu.core_type = #tpu.core_type<tc>, window_params = [{transform_indices = @transform_0, window_bounds = array<i64: 64, 128>}, {transform_indices = @transform_1, window_bounds = array<i64: 128, 256>}, {transform_indices = @transform_2, window_bounds = array<i64: 1, 256>}, {transform_indices = @transform_3, window_bounds = array<i64: 64, 256>}]} {
    %c0_i32 = arith.constant 0 : i32
    %0 = arith.cmpi eq, %arg2, %c0_i32 : i32
    %1 = arith.extui %0 : i1 to i32
    %c0_i32_0 = arith.constant 0 : i32
    %2 = arith.cmpi ne, %1, %c0_i32_0 : i32
    scf.if %2 {
      %cst_10 = arith.constant 0.000000e+00 : f32
      %12 = vector.broadcast %cst_10 : f32 to vector<64x256xf32>
      %c0_11 = arith.constant 0 : index
      %c0_12 = arith.constant 0 : index
      %13 = vector.load %arg7[%c0_11, %c0_12] : memref<64x256xf32, #tpu.memory_space<vmem>>, vector<64x256xf32>
      tpu.vector_store %arg7[%c0_11, %c0_12], %12 {strides = array<i32>} : memref<64x256xf32, #tpu.memory_space<vmem>>, vector<64x256xf32>,
    } else {
    }
    %c0 = arith.constant 0 : index
    %c0_1 = arith.constant 0 : index
    %3 = vector.load %arg7[%c0, %c0_1] : memref<64x256xf32, #tpu.memory_space<vmem>>, vector<64x256xf32>
    %c0_2 = arith.constant 0 : index
    %c0_3 = arith.constant 0 : index
    %4 = vector.load %arg3[%c0_2, %c0_3] : memref<64x128xf32, #tpu.memory_space<vmem>>, vector<64x128xf32>
    %c0_4 = arith.constant 0 : index
    %c0_5 = arith.constant 0 : index
    %5 = vector.load %arg4[%c0_4, %c0_5] : memref<128x256xf32, #tpu.memory_space<vmem>>, vector<128x256xf32>
    %cst = arith.constant dense<0.000000e+00> : vector<64x256xf32>
    %6 = tpu.matmul %4, %5, %cst {dimension_numbers = #tpu.dot_dimension_numbers<[1], [0], [0], [1], [0, 0, 1, 1], [], []>} : vector<64x128xf32>, vector<128x256xf32>, vector<64x256xf32> -> vector<64x256xf32>
    %7 = arith.addf %3, %6 : vector<64x256xf32>
    %c0_6 = arith.constant 0 : index
    %c0_7 = arith.constant 0 : index
    %8 = vector.load %arg7[%c0_6, %c0_7] : memref<64x256xf32, #tpu.memory_space<vmem>>, vector<64x256xf32>
    tpu.vector_store %arg7[%c0_6, %c0_7], %7 {strides = array<i32>} : memref<64x256xf32, #tpu.memory_space<vmem>>, vector<64x256xf32>,
    %c0_i32_8 = arith.constant 0 : i32
    %9 = arith.cmpi eq, %arg2, %c0_i32_8 : i32
    %10 = arith.extui %9 : i1 to i32
    %c0_i32_9 = arith.constant 0 : i32
    %11 = arith.cmpi ne, %10, %c0_i32_9 : i32
    scf.if %11 {
      %c0_10 = arith.constant 0 : index
      %c0_11 = arith.constant 0 : index
      %12 = vector.load %arg7[%c0_10, %c0_11] : memref<64x256xf32, #tpu.memory_space<vmem>>, vector<64x256xf32>
      %c0_12 = arith.constant 0 : index
      %c0_13 = arith.constant 0 : index
      %13 = vector.load %arg5[%c0_12, %c0_13] : memref<1x256xf32, #tpu.memory_space<vmem>>, vector<1x256xf32>
      %14 = vector.broadcast %13 : vector<1x256xf32> to vector<64x256xf32>
      %15 = arith.addf %12, %14 : vector<64x256xf32>
      %c0_14 = arith.constant 0 : index
      %c0_15 = arith.constant 0 : index
      %16 = vector.load %arg6[%c0_14, %c0_15] : memref<64x256xf32, #tpu.memory_space<vmem>>, vector<64x256xf32>
      tpu.vector_store %arg6[%c0_14, %c0_15], %15 {strides = array<i32>} : memref<64x256xf32, #tpu.memory_space<vmem>>, vector<64x256xf32>,
    } else {
    }
    return
  }
  func.func @transform_0(%arg0: i32, %arg1: i32, %arg2: i32) -> (i32, i32) {
    %c0_i32 = arith.constant 0 : i32
    return %arg0, %arg2 : i32, i32
  }
  func.func @transform_1(%arg0: i32, %arg1: i32, %arg2: i32) -> (i32, i32) {
    %c0_i32 = arith.constant 0 : i32
    return %arg2, %arg1 : i32, i32
  }
  func.func @transform_2(%arg0: i32, %arg1: i32, %arg2: i32) -> (i32, i32) {
    %c0_i32 = arith.constant 0 : i32
    %c0_i32_0 = arith.constant 0 : i32
    return %c0_i32, %arg1 : i32, i32
  }
  func.func @transform_3(%arg0: i32, %arg1: i32, %arg2: i32) -> (i32, i32) {
    %c0_i32 = arith.constant 0 : i32
    return %arg0, %arg1 : i32, i32
  }
}

module attributes {stable_mosaic.version = 11 : i64} {
  func.func @_rnn_recurrent_kernel(%arg0: i32, %arg1: memref<8x8x256xf32, #tpu.memory_space<vmem>>, %arg2: memref<256x256xf32, #tpu.memory_space<vmem>>, %arg3: memref<8x8x256xf32, #tpu.memory_space<vmem>>, %arg4: memref<8x256xf32, #tpu.memory_space<vmem>>, %arg5: memref<8x256xf32, #tpu.memory_space<vmem>>) attributes {dimension_semantics = [#tpu.dimension_semantics<arbitrary>], iteration_bounds = array<i64: 1>, scalar_prefetch = 0 : i64, scratch_operands = 1 : i64, tpu.core_type = #tpu.core_type<tc>, window_params = [{transform_indices = @transform_0, window_bounds = array<i64: 8, 8, 256>}, {pipeline_mode = #tpu.pipeline_mode<synchronous>, transform_indices = @transform_1, window_bounds = array<i64: 256, 256>}, {transform_indices = @transform_2, window_bounds = array<i64: 8, 8, 256>}, {pipeline_mode = #tpu.pipeline_mode<synchronous>, transform_indices = @transform_3, window_bounds = array<i64: 8, 256>}]} {
    %c0_i32 = arith.constant 0 : i32
    %0 = arith.cmpi eq, %arg0, %c0_i32 : i32
    %1 = arith.extui %0 : i1 to i32
    %c0_i32_0 = arith.constant 0 : i32
    %2 = arith.cmpi ne, %1, %c0_i32_0 : i32
    scf.if %2 {
      %cst_56 = arith.constant 0.000000e+00 : f32
      %73 = vector.broadcast %cst_56 : f32 to vector<8x256xf32>
      %c0_57 = arith.constant 0 : index
      %c0_58 = arith.constant 0 : index
      %74 = vector.load %arg5[%c0_57, %c0_58] : memref<8x256xf32, #tpu.memory_space<vmem>>, vector<8x256xf32>
      tpu.vector_store %arg5[%c0_57, %c0_58], %73 {strides = array<i32>} : memref<8x256xf32, #tpu.memory_space<vmem>>, vector<8x256xf32>,
    } else {
    }
    %c0 = arith.constant 0 : index
    %c0_1 = arith.constant 0 : index
    %3 = vector.load %arg2[%c0, %c0_1] : memref<256x256xf32, #tpu.memory_space<vmem>>, vector<256x256xf32>
    %c0_2 = arith.constant 0 : index
    %c0_3 = arith.constant 0 : index
    %4 = vector.load %arg5[%c0_2, %c0_3] : memref<8x256xf32, #tpu.memory_space<vmem>>, vector<8x256xf32>
    %c0_4 = arith.constant 0 : index
    %c0_5 = arith.constant 0 : index
    %c0_6 = arith.constant 0 : index
    %5 = vector.load %arg1[%c0_4, %c0_5, %c0_6] : memref<8x8x256xf32, #tpu.memory_space<vmem>>, vector<1x8x256xf32>
    %6 = vector.shape_cast %5 : vector<1x8x256xf32> to vector<8x256xf32>
    %cst = arith.constant dense<0.000000e+00> : vector<8x256xf32>
    %7 = tpu.matmul %4, %3, %cst {dimension_numbers = #tpu.dot_dimension_numbers<[1], [0], [0], [1], [0, 0, 1, 1], [], []>} : vector<8x256xf32>, vector<256x256xf32>, vector<8x256xf32> -> vector<8x256xf32>
    %8 = arith.addf %6, %7 : vector<8x256xf32>
    %9 = math.tanh %8 : vector<8x256xf32>
    %c0_7 = arith.constant 0 : index
    %c0_8 = arith.constant 0 : index
    %c0_9 = arith.constant 0 : index
    %10 = vector.load %arg3[%c0_7, %c0_8, %c0_9] : memref<8x8x256xf32, #tpu.memory_space<vmem>>, vector<1x8x256xf32>
    %11 = vector.shape_cast %10 : vector<1x8x256xf32> to vector<8x256xf32>
    %12 = vector.shape_cast %9 : vector<8x256xf32> to vector<1x8x256xf32>
    tpu.vector_store %arg3[%c0_7, %c0_8, %c0_9], %12 {strides = array<i32>} : memref<8x8x256xf32, #tpu.memory_space<vmem>>, vector<1x8x256xf32>,
    %c1 = arith.constant 1 : index
    %c0_10 = arith.constant 0 : index
    %c0_11 = arith.constant 0 : index
    %13 = vector.load %arg1[%c1, %c0_10, %c0_11] : memref<8x8x256xf32, #tpu.memory_space<vmem>>, vector<1x8x256xf32>
    %14 = vector.shape_cast %13 : vector<1x8x256xf32> to vector<8x256xf32>
    %cst_12 = arith.constant dense<0.000000e+00> : vector<8x256xf32>
    %15 = tpu.matmul %9, %3, %cst_12 {dimension_numbers = #tpu.dot_dimension_numbers<[1], [0], [0], [1], [0, 0, 1, 1], [], []>} : vector<8x256xf32>, vector<256x256xf32>, vector<8x256xf32> -> vector<8x256xf32>
    %16 = arith.addf %14, %15 : vector<8x256xf32>
    %17 = math.tanh %16 : vector<8x256xf32>
    %c1_13 = arith.constant 1 : index
    %c0_14 = arith.constant 0 : index
    %c0_15 = arith.constant 0 : index
    %18 = vector.load %arg3[%c1_13, %c0_14, %c0_15] : memref<8x8x256xf32, #tpu.memory_space<vmem>>, vector<1x8x256xf32>
    %19 = vector.shape_cast %18 : vector<1x8x256xf32> to vector<8x256xf32>
    %20 = vector.shape_cast %17 : vector<8x256xf32> to vector<1x8x256xf32>
    tpu.vector_store %arg3[%c1_13, %c0_14, %c0_15], %20 {strides = array<i32>} : memref<8x8x256xf32, #tpu.memory_space<vmem>>, vector<1x8x256xf32>,
    %c2 = arith.constant 2 : index
    %c0_16 = arith.constant 0 : index
    %c0_17 = arith.constant 0 : index
    %21 = vector.load %arg1[%c2, %c0_16, %c0_17] : memref<8x8x256xf32, #tpu.memory_space<vmem>>, vector<1x8x256xf32>
    %22 = vector.shape_cast %21 : vector<1x8x256xf32> to vector<8x256xf32>
    %cst_18 = arith.constant dense<0.000000e+00> : vector<8x256xf32>
    %23 = tpu.matmul %17, %3, %cst_18 {dimension_numbers = #tpu.dot_dimension_numbers<[1], [0], [0], [1], [0, 0, 1, 1], [], []>} : vector<8x256xf32>, vector<256x256xf32>, vector<8x256xf32> -> vector<8x256xf32>
    %24 = arith.addf %22, %23 : vector<8x256xf32>
    %25 = math.tanh %24 : vector<8x256xf32>
    %c2_19 = arith.constant 2 : index
    %c0_20 = arith.constant 0 : index
    %c0_21 = arith.constant 0 : index
    %26 = vector.load %arg3[%c2_19, %c0_20, %c0_21] : memref<8x8x256xf32, #tpu.memory_space<vmem>>, vector<1x8x256xf32>
    %27 = vector.shape_cast %26 : vector<1x8x256xf32> to vector<8x256xf32>
    %28 = vector.shape_cast %25 : vector<8x256xf32> to vector<1x8x256xf32>
    tpu.vector_store %arg3[%c2_19, %c0_20, %c0_21], %28 {strides = array<i32>} : memref<8x8x256xf32, #tpu.memory_space<vmem>>, vector<1x8x256xf32>,
    %c3 = arith.constant 3 : index
    %c0_22 = arith.constant 0 : index
    %c0_23 = arith.constant 0 : index
    %29 = vector.load %arg1[%c3, %c0_22, %c0_23] : memref<8x8x256xf32, #tpu.memory_space<vmem>>, vector<1x8x256xf32>
    %30 = vector.shape_cast %29 : vector<1x8x256xf32> to vector<8x256xf32>
    %cst_24 = arith.constant dense<0.000000e+00> : vector<8x256xf32>
    %31 = tpu.matmul %25, %3, %cst_24 {dimension_numbers = #tpu.dot_dimension_numbers<[1], [0], [0], [1], [0, 0, 1, 1], [], []>} : vector<8x256xf32>, vector<256x256xf32>, vector<8x256xf32> -> vector<8x256xf32>
    %32 = arith.addf %30, %31 : vector<8x256xf32>
    %33 = math.tanh %32 : vector<8x256xf32>
    %c3_25 = arith.constant 3 : index
    %c0_26 = arith.constant 0 : index
    %c0_27 = arith.constant 0 : index
    %34 = vector.load %arg3[%c3_25, %c0_26, %c0_27] : memref<8x8x256xf32, #tpu.memory_space<vmem>>, vector<1x8x256xf32>
    %35 = vector.shape_cast %34 : vector<1x8x256xf32> to vector<8x256xf32>
    %36 = vector.shape_cast %33 : vector<8x256xf32> to vector<1x8x256xf32>
    tpu.vector_store %arg3[%c3_25, %c0_26, %c0_27], %36 {strides = array<i32>} : memref<8x8x256xf32, #tpu.memory_space<vmem>>, vector<1x8x256xf32>,
    %c4 = arith.constant 4 : index
    %c0_28 = arith.constant 0 : index
    %c0_29 = arith.constant 0 : index
    %37 = vector.load %arg1[%c4, %c0_28, %c0_29] : memref<8x8x256xf32, #tpu.memory_space<vmem>>, vector<1x8x256xf32>
    %38 = vector.shape_cast %37 : vector<1x8x256xf32> to vector<8x256xf32>
    %cst_30 = arith.constant dense<0.000000e+00> : vector<8x256xf32>
    %39 = tpu.matmul %33, %3, %cst_30 {dimension_numbers = #tpu.dot_dimension_numbers<[1], [0], [0], [1], [0, 0, 1, 1], [], []>} : vector<8x256xf32>, vector<256x256xf32>, vector<8x256xf32> -> vector<8x256xf32>
    %40 = arith.addf %38, %39 : vector<8x256xf32>
    %41 = math.tanh %40 : vector<8x256xf32>
    %c4_31 = arith.constant 4 : index
    %c0_32 = arith.constant 0 : index
    %c0_33 = arith.constant 0 : index
    %42 = vector.load %arg3[%c4_31, %c0_32, %c0_33] : memref<8x8x256xf32, #tpu.memory_space<vmem>>, vector<1x8x256xf32>
    %43 = vector.shape_cast %42 : vector<1x8x256xf32> to vector<8x256xf32>
    %44 = vector.shape_cast %41 : vector<8x256xf32> to vector<1x8x256xf32>
    tpu.vector_store %arg3[%c4_31, %c0_32, %c0_33], %44 {strides = array<i32>} : memref<8x8x256xf32, #tpu.memory_space<vmem>>, vector<1x8x256xf32>,
    %c5 = arith.constant 5 : index
    %c0_34 = arith.constant 0 : index
    %c0_35 = arith.constant 0 : index
    %45 = vector.load %arg1[%c5, %c0_34, %c0_35] : memref<8x8x256xf32, #tpu.memory_space<vmem>>, vector<1x8x256xf32>
    %46 = vector.shape_cast %45 : vector<1x8x256xf32> to vector<8x256xf32>
    %cst_36 = arith.constant dense<0.000000e+00> : vector<8x256xf32>
    %47 = tpu.matmul %41, %3, %cst_36 {dimension_numbers = #tpu.dot_dimension_numbers<[1], [0], [0], [1], [0, 0, 1, 1], [], []>} : vector<8x256xf32>, vector<256x256xf32>, vector<8x256xf32> -> vector<8x256xf32>
    %48 = arith.addf %46, %47 : vector<8x256xf32>
    %49 = math.tanh %48 : vector<8x256xf32>
    %c5_37 = arith.constant 5 : index
    %c0_38 = arith.constant 0 : index
    %c0_39 = arith.constant 0 : index
    %50 = vector.load %arg3[%c5_37, %c0_38, %c0_39] : memref<8x8x256xf32, #tpu.memory_space<vmem>>, vector<1x8x256xf32>
    %51 = vector.shape_cast %50 : vector<1x8x256xf32> to vector<8x256xf32>
    %52 = vector.shape_cast %49 : vector<8x256xf32> to vector<1x8x256xf32>
    tpu.vector_store %arg3[%c5_37, %c0_38, %c0_39], %52 {strides = array<i32>} : memref<8x8x256xf32, #tpu.memory_space<vmem>>, vector<1x8x256xf32>,
    %c6 = arith.constant 6 : index
    %c0_40 = arith.constant 0 : index
    %c0_41 = arith.constant 0 : index
    %53 = vector.load %arg1[%c6, %c0_40, %c0_41] : memref<8x8x256xf32, #tpu.memory_space<vmem>>, vector<1x8x256xf32>
    %54 = vector.shape_cast %53 : vector<1x8x256xf32> to vector<8x256xf32>
    %cst_42 = arith.constant dense<0.000000e+00> : vector<8x256xf32>
    %55 = tpu.matmul %49, %3, %cst_42 {dimension_numbers = #tpu.dot_dimension_numbers<[1], [0], [0], [1], [0, 0, 1, 1], [], []>} : vector<8x256xf32>, vector<256x256xf32>, vector<8x256xf32> -> vector<8x256xf32>
    %56 = arith.addf %54, %55 : vector<8x256xf32>
    %57 = math.tanh %56 : vector<8x256xf32>
    %c6_43 = arith.constant 6 : index
    %c0_44 = arith.constant 0 : index
    %c0_45 = arith.constant 0 : index
    %58 = vector.load %arg3[%c6_43, %c0_44, %c0_45] : memref<8x8x256xf32, #tpu.memory_space<vmem>>, vector<1x8x256xf32>
    %59 = vector.shape_cast %58 : vector<1x8x256xf32> to vector<8x256xf32>
    %60 = vector.shape_cast %57 : vector<8x256xf32> to vector<1x8x256xf32>
    tpu.vector_store %arg3[%c6_43, %c0_44, %c0_45], %60 {strides = array<i32>} : memref<8x8x256xf32, #tpu.memory_space<vmem>>, vector<1x8x256xf32>,
    %c7 = arith.constant 7 : index
    %c0_46 = arith.constant 0 : index
    %c0_47 = arith.constant 0 : index
    %61 = vector.load %arg1[%c7, %c0_46, %c0_47] : memref<8x8x256xf32, #tpu.memory_space<vmem>>, vector<1x8x256xf32>
    %62 = vector.shape_cast %61 : vector<1x8x256xf32> to vector<8x256xf32>
    %cst_48 = arith.constant dense<0.000000e+00> : vector<8x256xf32>
    %63 = tpu.matmul %57, %3, %cst_48 {dimension_numbers = #tpu.dot_dimension_numbers<[1], [0], [0], [1], [0, 0, 1, 1], [], []>} : vector<8x256xf32>, vector<256x256xf32>, vector<8x256xf32> -> vector<8x256xf32>
    %64 = arith.addf %62, %63 : vector<8x256xf32>
    %65 = math.tanh %64 : vector<8x256xf32>
    %c7_49 = arith.constant 7 : index
    %c0_50 = arith.constant 0 : index
    %c0_51 = arith.constant 0 : index
    %66 = vector.load %arg3[%c7_49, %c0_50, %c0_51] : memref<8x8x256xf32, #tpu.memory_space<vmem>>, vector<1x8x256xf32>
    %67 = vector.shape_cast %66 : vector<1x8x256xf32> to vector<8x256xf32>
    %68 = vector.shape_cast %65 : vector<8x256xf32> to vector<1x8x256xf32>
    tpu.vector_store %arg3[%c7_49, %c0_50, %c0_51], %68 {strides = array<i32>} : memref<8x8x256xf32, #tpu.memory_space<vmem>>, vector<1x8x256xf32>,
    %c0_52 = arith.constant 0 : index
    %c0_53 = arith.constant 0 : index
    %69 = vector.load %arg5[%c0_52, %c0_53] : memref<8x256xf32, #tpu.memory_space<vmem>>, vector<8x256xf32>
    tpu.vector_store %arg5[%c0_52, %c0_53], %65 {strides = array<i32>} : memref<8x256xf32, #tpu.memory_space<vmem>>, vector<8x256xf32>,
    %c0_i32_54 = arith.constant 0 : i32
    %70 = arith.cmpi eq, %arg0, %c0_i32_54 : i32
    %71 = arith.extui %70 : i1 to i32
    %c0_i32_55 = arith.constant 0 : i32
    %72 = arith.cmpi ne, %71, %c0_i32_55 : i32
    scf.if %72 {
      %c0_56 = arith.constant 0 : index
      %c0_57 = arith.constant 0 : index
      %73 = vector.load %arg4[%c0_56, %c0_57] : memref<8x256xf32, #tpu.memory_space<vmem>>, vector<8x256xf32>
      tpu.vector_store %arg4[%c0_56, %c0_57], %65 {strides = array<i32>} : memref<8x256xf32, #tpu.memory_space<vmem>>, vector<8x256xf32>,
    } else {
    }
    return
  }
  func.func @transform_0(%arg0: i32) -> (i32, i32, i32) {
    %c0_i32 = arith.constant 0 : i32
    %c0_i32_0 = arith.constant 0 : i32
    %c0_i32_1 = arith.constant 0 : i32
    return %arg0, %c0_i32, %c0_i32_0 : i32, i32, i32
  }
  func.func @transform_1(%arg0: i32) -> (i32, i32) {
    %c0_i32 = arith.constant 0 : i32
    %c0_i32_0 = arith.constant 0 : i32
    %c0_i32_1 = arith.constant 0 : i32
    return %c0_i32, %c0_i32_0 : i32, i32
  }
  func.func @transform_2(%arg0: i32) -> (i32, i32, i32) {
    %c0_i32 = arith.constant 0 : i32
    %c0_i32_0 = arith.constant 0 : i32
    %c0_i32_1 = arith.constant 0 : i32
    return %arg0, %c0_i32, %c0_i32_0 : i32, i32, i32
  }
  func.func @transform_3(%arg0: i32) -> (i32, i32) {
    %c0_i32 = arith.constant 0 : i32
    %c0_i32_0 = arith.constant 0 : i32
    %c0_i32_1 = arith.constant 0 : i32
    return %c0_i32, %c0_i32_0 : i32, i32
  }
}

module attributes {stable_mosaic.version = 11 : i64} {
  func.func @_matmul_bias_kernel(%arg0: i32, %arg1: i32, %arg2: i32, %arg3: memref<64x256xf32, #tpu.memory_space<vmem>>, %arg4: memref<256x256xf32, #tpu.memory_space<vmem>>, %arg5: memref<1x256xf32, #tpu.memory_space<vmem>>, %arg6: memref<64x256xf32, #tpu.memory_space<vmem>>, %arg7: memref<64x256xf32, #tpu.memory_space<vmem>>) attributes {dimension_semantics = [#tpu.dimension_semantics<parallel>, #tpu.dimension_semantics<parallel>, #tpu.dimension_semantics<arbitrary>], iteration_bounds = array<i64: 1, 1, 1>, scalar_prefetch = 0 : i64, scratch_operands = 1 : i64, tpu.core_type = #tpu.core_type<tc>, window_params = [{transform_indices = @transform_0, window_bounds = array<i64: 64, 256>}, {transform_indices = @transform_1, window_bounds = array<i64: 256, 256>}, {transform_indices = @transform_2, window_bounds = array<i64: 1, 256>}, {transform_indices = @transform_3, window_bounds = array<i64: 64, 256>}]} {
    %c0_i32 = arith.constant 0 : i32
    %0 = arith.cmpi eq, %arg2, %c0_i32 : i32
    %1 = arith.extui %0 : i1 to i32
    %c0_i32_0 = arith.constant 0 : i32
    %2 = arith.cmpi ne, %1, %c0_i32_0 : i32
    scf.if %2 {
      %cst_10 = arith.constant 0.000000e+00 : f32
      %12 = vector.broadcast %cst_10 : f32 to vector<64x256xf32>
      %c0_11 = arith.constant 0 : index
      %c0_12 = arith.constant 0 : index
      %13 = vector.load %arg7[%c0_11, %c0_12] : memref<64x256xf32, #tpu.memory_space<vmem>>, vector<64x256xf32>
      tpu.vector_store %arg7[%c0_11, %c0_12], %12 {strides = array<i32>} : memref<64x256xf32, #tpu.memory_space<vmem>>, vector<64x256xf32>,
    } else {
    }
    %c0 = arith.constant 0 : index
    %c0_1 = arith.constant 0 : index
    %3 = vector.load %arg7[%c0, %c0_1] : memref<64x256xf32, #tpu.memory_space<vmem>>, vector<64x256xf32>
    %c0_2 = arith.constant 0 : index
    %c0_3 = arith.constant 0 : index
    %4 = vector.load %arg3[%c0_2, %c0_3] : memref<64x256xf32, #tpu.memory_space<vmem>>, vector<64x256xf32>
    %c0_4 = arith.constant 0 : index
    %c0_5 = arith.constant 0 : index
    %5 = vector.load %arg4[%c0_4, %c0_5] : memref<256x256xf32, #tpu.memory_space<vmem>>, vector<256x256xf32>
    %cst = arith.constant dense<0.000000e+00> : vector<64x256xf32>
    %6 = tpu.matmul %4, %5, %cst {dimension_numbers = #tpu.dot_dimension_numbers<[1], [0], [0], [1], [0, 0, 1, 1], [], []>} : vector<64x256xf32>, vector<256x256xf32>, vector<64x256xf32> -> vector<64x256xf32>
    %7 = arith.addf %3, %6 : vector<64x256xf32>
    %c0_6 = arith.constant 0 : index
    %c0_7 = arith.constant 0 : index
    %8 = vector.load %arg7[%c0_6, %c0_7] : memref<64x256xf32, #tpu.memory_space<vmem>>, vector<64x256xf32>
    tpu.vector_store %arg7[%c0_6, %c0_7], %7 {strides = array<i32>} : memref<64x256xf32, #tpu.memory_space<vmem>>, vector<64x256xf32>,
    %c0_i32_8 = arith.constant 0 : i32
    %9 = arith.cmpi eq, %arg2, %c0_i32_8 : i32
    %10 = arith.extui %9 : i1 to i32
    %c0_i32_9 = arith.constant 0 : i32
    %11 = arith.cmpi ne, %10, %c0_i32_9 : i32
    scf.if %11 {
      %c0_10 = arith.constant 0 : index
      %c0_11 = arith.constant 0 : index
      %12 = vector.load %arg7[%c0_10, %c0_11] : memref<64x256xf32, #tpu.memory_space<vmem>>, vector<64x256xf32>
      %c0_12 = arith.constant 0 : index
      %c0_13 = arith.constant 0 : index
      %13 = vector.load %arg5[%c0_12, %c0_13] : memref<1x256xf32, #tpu.memory_space<vmem>>, vector<1x256xf32>
      %14 = vector.broadcast %13 : vector<1x256xf32> to vector<64x256xf32>
      %15 = arith.addf %12, %14 : vector<64x256xf32>
      %c0_14 = arith.constant 0 : index
      %c0_15 = arith.constant 0 : index
      %16 = vector.load %arg6[%c0_14, %c0_15] : memref<64x256xf32, #tpu.memory_space<vmem>>, vector<64x256xf32>
      tpu.vector_store %arg6[%c0_14, %c0_15], %15 {strides = array<i32>} : memref<64x256xf32, #tpu.memory_space<vmem>>, vector<64x256xf32>,
    } else {
    }
    return
  }
  func.func @transform_0(%arg0: i32, %arg1: i32, %arg2: i32) -> (i32, i32) {
    %c0_i32 = arith.constant 0 : i32
    return %arg0, %arg2 : i32, i32
  }
  func.func @transform_1(%arg0: i32, %arg1: i32, %arg2: i32) -> (i32, i32) {
    %c0_i32 = arith.constant 0 : i32
    return %arg2, %arg1 : i32, i32
  }
  func.func @transform_2(%arg0: i32, %arg1: i32, %arg2: i32) -> (i32, i32) {
    %c0_i32 = arith.constant 0 : i32
    %c0_i32_0 = arith.constant 0 : i32
    return %c0_i32, %arg1 : i32, i32
  }
  func.func @transform_3(%arg0: i32, %arg1: i32, %arg2: i32) -> (i32, i32) {
    %c0_i32 = arith.constant 0 : i32
    return %arg0, %arg1 : i32, i32
  }
}

</mosaic_0001>

<llo_original>
// kernel: rnn_lm_forward.3
$region0: #{rnn_lm_forward.3}
  #allocation0 [shape = 'u32[]', space=smem, size = 0x4, offset = 0x4, fixed_abs, tag = 'smem constant byte address 0x4 - core index']
  #allocation1 [shape = 'u32[144,128]{1,0:T(1,128)}', space=vmem, size = 0x12000, scoped, tag = 'internal scratch']
  #allocation2 [shape = 'f32[64,256]{1,0:T(8,128)}', space=vmem, size = 0x10000, scoped, tag = 'scratch operand']
  %s0 = inlined_call_operand.vmem [shape: f32[64,128], index: 0, kind: input, shape index: {}]
  %s1 = inlined_call_operand.hbm [shape: f32[128,256], index: 1, kind: input, shape index: {}]
  %s2 = inlined_call_operand.hbm [shape: f32[1,256], index: 2, kind: input, shape index: {}]
  %s3 = inlined_call_operand.vmem [shape: f32[64,256], index: 3, kind: output, shape index: {}]
  %s4 = sld [smem:[#allocation0]]
  $region38: #{rnn_lm_forward.3} parent=0
    _
  %s6 = ssub.s32 1, %s4
  %s7 = scalar_select 0, %s6, %s4
  $region1: #{rnn_lm_forward.3} parent=0
    #allocation3 [shape = 'u8[131072]{0}', space=vmem, size = 0x20000, scoped, tag = 'input window, operand 1, single buffered']
    #allocation4 [shape = 's32[1]{0}', space=sflag, size = 0x4, scoped, tag = 'scoped memory for rnn_lm_forward.3']
    #allocation5 [shape = 'u8[1024]{0}', space=vmem, size = 0x400, scoped, tag = 'input window, operand 2, single buffered']
    #allocation6 [shape = 's32[1]{0}', space=sflag, size = 0x4, scoped, tag = 'scoped memory for rnn_lm_forward.3']
    %8 = vsyncpa [#allocation4], 0
    %9 = vsyncpa [#allocation6], 0
    // Predicated region
    $region2: #{rnn_lm_forward.3} parent=1 // pred_check
      _
    $region3: #{rnn_lm_forward.3} parent=1 // pred_check_branch
      %11 = sbr.rel (0) target = $region5
    $region4: #{rnn_lm_forward.3} parent=1 // pred_region
      _
    $region5: #{rnn_lm_forward.3} parent=1 // pred_fallthru
      _
    // Predicated region
    $region6: #{rnn_lm_forward.3} parent=1 // pred_check
      _
    $region7: #{rnn_lm_forward.3} parent=1 // pred_check_branch
      %13 = sbr.rel (0) target = $region9
    $region8: #{rnn_lm_forward.3} parent=1 // pred_region
      %s15 = ssub.s32 4096, 4096
      %16 = vsyncadd [#allocation4], %s15
      %s17 = sshll.u32 [#allocation3], 4
      %s18 = int_to_ptr.vmem [resolvable:$true] %s17
      %23 = dma.hbm_to_vmem [thread:$0]  %s1, 4096, %s18, [#allocation4], 256, 256, 16
    $region9: #{rnn_lm_forward.3} parent=1 // pred_fallthru
      _
    // Predicated region
    $region10: #{rnn_lm_forward.3} parent=1 // pred_check
      _
    $region11: #{rnn_lm_forward.3} parent=1 // pred_check_branch
      %25 = sbr.rel (0) target = $region13
    $region12: #{rnn_lm_forward.3} parent=1 // pred_region
      %s27 = ssub.s32 32, 32
      %28 = vsyncadd [#allocation6], %s27
      %s30 = sshll.u32 [#allocation5], 4
      %s31 = int_to_ptr.vmem [resolvable:$true] %s30
      %33 = dma.hbm_to_vmem [thread:$0]  %s2, 32, %s31, [#allocation6]
    $region13: #{rnn_lm_forward.3} parent=1 // pred_fallthru
      _
    // Predicated region
    $region14: #{rnn_lm_forward.3} parent=1 // pred_check
      _
    $region15: #{rnn_lm_forward.3} parent=1 // pred_check_branch
      %35 = sbr.rel (0) target = $region17
    $region16: #{rnn_lm_forward.3} parent=1 // pred_region
      %36 = dma.done [#allocation4], 4096
    $region17: #{rnn_lm_forward.3} parent=1 // pred_fallthru
      _
    // Predicated region
    $region18: #{rnn_lm_forward.3} parent=1 // pred_check
      _
    $region19: #{rnn_lm_forward.3} parent=1 // pred_check_branch
      %38 = sbr.rel (0) target = $region21
    $region20: #{rnn_lm_forward.3} parent=1 // pred_region
      %39 = dma.done [#allocation6], 32
    $region21: #{rnn_lm_forward.3} parent=1 // pred_fallthru
      _
    %p40 = scmp.eq.s32.totalorder 0, 0
    // Predicated region
    $region22: #{rnn_lm_forward.3} parent=1 // pred_check
      %p41 = pneg %p40
    $region23: #{rnn_lm_forward.3} parent=1 // pred_check_branch
      %43 = sbr.rel (%p41) target = $region25
    $region24: #{rnn_lm_forward.3} parent=1 // pred_region
      %44 = vst [vmem:[#allocation2] sm:$0xff] 0.0
      %45 = vst [vmem:[#allocation2 + $0x8] sm:$0xff] 0.0
      %46 = vst [vmem:[#allocation2 + $0x10] sm:$0xff] 0.0
      %47 = vst [vmem:[#allocation2 + $0x18] sm:$0xff] 0.0
      %48 = vst [vmem:[#allocation2 + $0x20] sm:$0xff] 0.0
      %49 = vst [vmem:[#allocation2 + $0x28] sm:$0xff] 0.0
      %50 = vst [vmem:[#allocation2 + $0x30] sm:$0xff] 0.0
      %51 = vst [vmem:[#allocation2 + $0x38] sm:$0xff] 0.0
      %52 = vst [vmem:[#allocation2 + $0x40] sm:$0xff] 0.0
      %53 = vst [vmem:[#allocation2 + $0x48] sm:$0xff] 0.0
      %54 = vst [vmem:[#allocation2 + $0x50] sm:$0xff] 0.0
      %55 = vst [vmem:[#allocation2 + $0x58] sm:$0xff] 0.0
      %56 = vst [vmem:[#allocation2 + $0x60] sm:$0xff] 0.0
      %57 = vst [vmem:[#allocation2 + $0x68] sm:$0xff] 0.0
      %58 = vst [vmem:[#allocation2 + $0x70] sm:$0xff] 0.0
      %59 = vst [vmem:[#allocation2 + $0x78] sm:$0xff] 0.0
    $region25: #{rnn_lm_forward.3} parent=1 // pred_fallthru
      _
    %v60 = vld [vmem:[#allocation2] sm:$0xff]
    %v61 = vld [vmem:[#allocation2 + $0x8] sm:$0xff]
    %v62 = vld [vmem:[#allocation2 + $0x10] sm:$0xff]
    %v63 = vld [vmem:[#allocation2 + $0x18] sm:$0xff]
    %v64 = vld [vmem:[#allocation2 + $0x20] sm:$0xff]
    %v65 = vld [vmem:[#allocation2 + $0x28] sm:$0xff]
    %v66 = vld [vmem:[#allocation2 + $0x30] sm:$0xff]
    %v67 = vld [vmem:[#allocation2 + $0x38] sm:$0xff]
    %v68 = vld [vmem:[#allocation2 + $0x40] sm:$0xff]
    %v69 = vld [vmem:[#allocation2 + $0x48] sm:$0xff]
    %v70 = vld [vmem:[#allocation2 + $0x50] sm:$0xff]
    %v71 = vld [vmem:[#allocation2 + $0x58] sm:$0xff]
    %v72 = vld [vmem:[#allocation2 + $0x60] sm:$0xff]
    %v73 = vld [vmem:[#allocation2 + $0x68] sm:$0xff]
    %v74 = vld [vmem:[#allocation2 + $0x70] sm:$0xff]
    %v75 = vld [vmem:[#allocation2 + $0x78] sm:$0xff]
    %v76 = vld [vmem:[%s0] sm:$0xff]
    %v77 = vld [vmem:[%s0 + $0x8] sm:$0xff]
    %v78 = vld [vmem:[%s0 + $0x10] sm:$0xff]
    %v79 = vld [vmem:[%s0 + $0x18] sm:$0xff]
    %v80 = vld [vmem:[%s0 + $0x20] sm:$0xff]
    %v81 = vld [vmem:[%s0 + $0x28] sm:$0xff]
    %v82 = vld [vmem:[%s0 + $0x30] sm:$0xff]
    %v83 = vld [vmem:[%s0 + $0x38] sm:$0xff]
    %v84 = vld [vmem:[#allocation3] sm:$0xff]
    %v85 = vld [vmem:[#allocation3 + $0x8] sm:$0xff]
    %v86 = vld [vmem:[#allocation3 + $0x10] sm:$0xff]
    %v87 = vld [vmem:[#allocation3 + $0x18] sm:$0xff]
    %v88 = vld [vmem:[#allocation3 + $0x20] sm:$0xff]
    %v89 = vld [vmem:[#allocation3 + $0x28] sm:$0xff]
    %v90 = vld [vmem:[#allocation3 + $0x30] sm:$0xff]
    %v91 = vld [vmem:[#allocation3 + $0x38] sm:$0xff]
    %v92 = vld [vmem:[#allocation3 + $0x40] sm:$0xff]
    %v93 = vld [vmem:[#allocation3 + $0x48] sm:$0xff]
    %v94 = vld [vmem:[#allocation3 + $0x50] sm:$0xff]
    %v95 = vld [vmem:[#allocation3 + $0x58] sm:$0xff]
    %v96 = vld [vmem:[#allocation3 + $0x60] sm:$0xff]
    %v97 = vld [vmem:[#allocation3 + $0x68] sm:$0xff]
    %v98 = vld [vmem:[#allocation3 + $0x70] sm:$0xff]
    %v99 = vld [vmem:[#allocation3 + $0x78] sm:$0xff]
    %v100 = vld [vmem:[#allocation3 + $0x80] sm:$0xff]
    %v101 = vld [vmem:[#allocation3 + $0x88] sm:$0xff]
    %v102 = vld [vmem:[#allocation3 + $0x90] sm:$0xff]
    %v103 = vld [vmem:[#allocation3 + $0x98] sm:$0xff]
    %v104 = vld [vmem:[#allocation3 + $0xa0] sm:$0xff]
    %v105 = vld [vmem:[#allocation3 + $0xa8] sm:$0xff]
    %v106 = vld [vmem:[#allocation3 + $0xb0] sm:$0xff]
    %v107 = vld [vmem:[#allocation3 + $0xb8] sm:$0xff]
    %v108 = vld [vmem:[#allocation3 + $0xc0] sm:$0xff]
    %v109 = vld [vmem:[#allocation3 + $0xc8] sm:$0xff]
    %v110 = vld [vmem:[#allocation3 + $0xd0] sm:$0xff]
    %v111 = vld [vmem:[#allocation3 + $0xd8] sm:$0xff]
    %v112 = vld [vmem:[#allocation3 + $0xe0] sm:$0xff]
    %v113 = vld [vmem:[#allocation3 + $0xe8] sm:$0xff]
    %v114 = vld [vmem:[#allocation3 + $0xf0] sm:$0xff]
    %v115 = vld [vmem:[#allocation3 + $0xf8] sm:$0xff]
    %116 = vmatprep.subr.mxu0 %v115
    %117 = vmatpush1.msra.mxu0 %v114
    %118 = vmatprep.subr.mxu0 %v113
    %119 = vmatpush1.msra.mxu0 %v112
    %120 = vmatprep.subr.mxu0 %v111
    %121 = vmatpush1.msra.mxu0 %v110
    %122 = vmatprep.subr.mxu0 %v109
    %123 = vmatpush1.msra.mxu0 %v108
    %124 = vmatprep.subr.mxu0 %v107
    %125 = vmatpush1.msra.mxu0 %v106
    %126 = vmatprep.subr.mxu0 %v105
    %127 = vmatpush1.msra.mxu0 %v104
    %128 = vmatprep.subr.mxu0 %v103
    %129 = vmatpush1.msra.mxu0 %v102
    %130 = vmatprep.subr.mxu0 %v101
    %131 = vmatpush1.msra.mxu0 %v100
    %132 = vmatprep.subr.mxu0 %v99
    %133 = vmatpush1.msra.mxu0 %v98
    %134 = vmatprep.subr.mxu0 %v97
    %135 = vmatpush1.msra.mxu0 %v96
    %136 = vmatprep.subr.mxu0 %v95
    %137 = vmatpush1.msra.mxu0 %v94
    %138 = vmatprep.subr.mxu0 %v93
    %139 = vmatpush1.msra.mxu0 %v92
    %140 = vmatprep.subr.mxu0 %v91
    %141 = vmatpush1.msra.mxu0 %v90
    %142 = vmatprep.subr.mxu0 %v89
    %143 = vmatpush1.msra.mxu0 %v88
    %144 = vmatprep.subr.mxu0 %v87
    %145 = vmatpush1.msra.mxu0 %v86
    %146 = vmatprep.subr.mxu0 %v85
    %147 = vmatpush1.msra.mxu0 %v84
    %148 = vmatprep.subr.mxu0 0.0
    %149 = vmatpush2.msra.mxu0 0.0
    %150 = vmatprep.subr.mxu0 0.0
    %151 = vmatpush2.msra.mxu0 0.0
    %152 = vmatprep.subr.mxu0 0.0
    %153 = vmatpush2.msra.mxu0 0.0
    %154 = vmatprep.subr.mxu0 0.0
    %155 = vmatpush2.msra.mxu0 0.0
    %156 = vmatprep.subr.mxu0 0.0
    %157 = vmatpush2.msra.mxu0 0.0
    %158 = vmatprep.subr.mxu0 0.0
    %159 = vmatpush2.msra.mxu0 0.0
    %160 = vmatprep.subr.mxu0 0.0
    %161 = vmatpush2.msra.mxu0 0.0
    %162 = vmatprep.subr.mxu0 0.0
    %163 = vmatpush2.msra.mxu0 0.0
    %164 = vmatprep.subr.mxu0 0.0
    %165 = vmatpush2.msra.mxu0 0.0
    %166 = vmatprep.subr.mxu0 0.0
    %167 = vmatpush2.msra.mxu0 0.0
    %168 = vmatprep.subr.mxu0 0.0
    %169 = vmatpush2.msra.mxu0 0.0
    %170 = vmatprep.subr.mxu0 0.0
    %171 = vmatpush2.msra.mxu0 0.0
    %172 = vmatprep.subr.mxu0 0.0
    %173 = vmatpush2.msra.mxu0 0.0
    %174 = vmatprep.subr.mxu0 0.0
    %175 = vmatpush2.msra.mxu0 0.0
    %176 = vmatprep.subr.mxu0 0.0
    %177 = vmatpush2.msra.mxu0 0.0
    %178 = vmatprep.subr.mxu0 0.0
    %179 = vmatpush2.msra.mxu0 0.0
    %180 = vmatprep.mubr.f32.mxu0 0.0
    %181 = vmatmul.mubr.f32.gmra.mxu0 %v76
    %v182 = vpop.f32.mrf.mxu0
    %v183 = vadd.f32 0.0, %v182
    %v184 = vpop.f32.mrf.mxu0
    %v185 = vadd.f32 0.0, %v184
    %186 = vmatprep.mubr.f32.mxu0 0.0
    %187 = vmatmul.mubr.f32.gmra.mxu0 %v77
    %v188 = vpop.f32.mrf.mxu0
    %v189 = vadd.f32 0.0, %v188
    %v190 = vpop.f32.mrf.mxu0
    %v191 = vadd.f32 0.0, %v190
    %192 = vmatprep.mubr.f32.mxu0 0.0
    %193 = vmatmul.mubr.f32.gmra.mxu0 %v78
    %v194 = vpop.f32.mrf.mxu0
    %v195 = vadd.f32 0.0, %v194
    %v196 = vpop.f32.mrf.mxu0
    %v197 = vadd.f32 0.0, %v196
    %198 = vmatprep.mubr.f32.mxu0 0.0
    %199 = vmatmul.mubr.f32.gmra.mxu0 %v79
    %v200 = vpop.f32.mrf.mxu0
    %v201 = vadd.f32 0.0, %v200
    %v202 = vpop.f32.mrf.mxu0
    %v203 = vadd.f32 0.0, %v202
    %204 = vmatprep.mubr.f32.mxu0 0.0
    %205 = vmatmul.mubr.f32.gmra.mxu0 %v80
    %v206 = vpop.f32.mrf.mxu0
    %v207 = vadd.f32 0.0, %v206
    %v208 = vpop.f32.mrf.mxu0
    %v209 = vadd.f32 0.0, %v208
    %210 = vmatprep.mubr.f32.mxu0 0.0
    %211 = vmatmul.mubr.f32.gmra.mxu0 %v81
    %v212 = vpop.f32.mrf.mxu0
    %v213 = vadd.f32 0.0, %v212
    %v214 = vpop.f32.mrf.mxu0
    %v215 = vadd.f32 0.0, %v214
    %216 = vmatprep.mubr.f32.mxu0 0.0
    %217 = vmatmul.mubr.f32.gmra.mxu0 %v82
    %v218 = vpop.f32.mrf.mxu0
    %v219 = vadd.f32 0.0, %v218
    %v220 = vpop.f32.mrf.mxu0
    %v221 = vadd.f32 0.0, %v220
    %222 = vmatprep.mubr.f32.mxu0 0.0
    %223 = vmatmul.mubr.f32.gmra.mxu0 %v83
    %v224 = vpop.f32.mrf.mxu0
    %v225 = vadd.f32 0.0, %v224
    %v226 = vpop.f32.mrf.mxu0
    %v227 = vadd.f32 0.0, %v226
    %228 = vdwg.mxu0
    %v229 = vadd.f32 %v60, %v183
    %v230 = vadd.f32 %v61, %v185
    %v231 = vadd.f32 %v62, %v189
    %v232 = vadd.f32 %v63, %v191
    %v233 = vadd.f32 %v64, %v195
    %v234 = vadd.f32 %v65, %v197
    %v235 = vadd.f32 %v66, %v201
    %v236 = vadd.f32 %v67, %v203
    %v237 = vadd.f32 %v68, %v207
    %v238 = vadd.f32 %v69, %v209
    %v239 = vadd.f32 %v70, %v213
    %v240 = vadd.f32 %v71, %v215
    %v241 = vadd.f32 %v72, %v219
    %v242 = vadd.f32 %v73, %v221
    %v243 = vadd.f32 %v74, %v225
    %v244 = vadd.f32 %v75, %v227
    %245 = vst [vmem:[#allocation2] sm:$0xff] %v229
    %246 = vst [vmem:[#allocation2 + $0x8] sm:$0xff] %v230
    %247 = vst [vmem:[#allocation2 + $0x10] sm:$0xff] %v231
    %248 = vst [vmem:[#allocation2 + $0x18] sm:$0xff] %v232
    %249 = vst [vmem:[#allocation2 + $0x20] sm:$0xff] %v233
    %250 = vst [vmem:[#allocation2 + $0x28] sm:$0xff] %v234
    %251 = vst [vmem:[#allocation2 + $0x30] sm:$0xff] %v235
    %252 = vst [vmem:[#allocation2 + $0x38] sm:$0xff] %v236
    %253 = vst [vmem:[#allocation2 + $0x40] sm:$0xff] %v237
    %254 = vst [vmem:[#allocation2 + $0x48] sm:$0xff] %v238
    %255 = vst [vmem:[#allocation2 + $0x50] sm:$0xff] %v239
    %256 = vst [vmem:[#allocation2 + $0x58] sm:$0xff] %v240
    %257 = vst [vmem:[#allocation2 + $0x60] sm:$0xff] %v241
    %258 = vst [vmem:[#allocation2 + $0x68] sm:$0xff] %v242
    %259 = vst [vmem:[#allocation2 + $0x70] sm:$0xff] %v243
    %260 = vst [vmem:[#allocation2 + $0x78] sm:$0xff] %v244
    // Predicated region
    $region26: #{rnn_lm_forward.3} parent=1 // pred_check
      %p261 = pneg %p40
    $region27: #{rnn_lm_forward.3} parent=1 // pred_check_branch
      %263 = sbr.rel (%p261) target = $region29
    $region28: #{rnn_lm_forward.3} parent=1 // pred_region
      %v264 = vld [vmem:[#allocation2] sm:$0xff]
      %v265 = vld [vmem:[#allocation2 + $0x8] sm:$0xff]
      %v266 = vld [vmem:[#allocation2 + $0x10] sm:$0xff]
      %v267 = vld [vmem:[#allocation2 + $0x18] sm:$0xff]
      %v268 = vld [vmem:[#allocation2 + $0x20] sm:$0xff]
      %v269 = vld [vmem:[#allocation2 + $0x28] sm:$0xff]
      %v270 = vld [vmem:[#allocation2 + $0x30] sm:$0xff]
      %v271 = vld [vmem:[#allocation2 + $0x38] sm:$0xff]
      %v272 = vld [vmem:[#allocation2 + $0x40] sm:$0xff]
      %v273 = vld [vmem:[#allocation2 + $0x48] sm:$0xff]
      %v274 = vld [vmem:[#allocation2 + $0x50] sm:$0xff]
      %v275 = vld [vmem:[#allocation2 + $0x58] sm:$0xff]
      %v276 = vld [vmem:[#allocation2 + $0x60] sm:$0xff]
      %v277 = vld [vmem:[#allocation2 + $0x68] sm:$0xff]
      %v278 = vld [vmem:[#allocation2 + $0x70] sm:$0xff]
      %v279 = vld [vmem:[#allocation2 + $0x78] sm:$0xff]
      %v280 = vld [vmem:[#allocation5] sm:$0x3]
      %v282 = vlaneseq
      %v283 = vshrl.u32 %v282, 7
      %v284 = vsub.s32 0, %v283
      %v285 = vrot.slane %v280, %v284
      %v286 = vlaneseq
      %v287 = vshrl.u32 %v286, 7
      %v288 = vsub.s32 1, %v287
      %v289 = vrot.slane %v280, %v288
      %v292 = vadd.f32 %v264, %v285
      %v293 = vadd.f32 %v265, %v289
      %v294 = vadd.f32 %v266, %v285
      %v295 = vadd.f32 %v267, %v289
      %v296 = vadd.f32 %v268, %v285
      %v297 = vadd.f32 %v269, %v289
      %v298 = vadd.f32 %v270, %v285
      %v299 = vadd.f32 %v271, %v289
      %v300 = vadd.f32 %v272, %v285
      %v301 = vadd.f32 %v273, %v289
      %v302 = vadd.f32 %v274, %v285
      %v303 = vadd.f32 %v275, %v289
      %v304 = vadd.f32 %v276, %v285
      %v305 = vadd.f32 %v277, %v289
      %v306 = vadd.f32 %v278, %v285
      %v307 = vadd.f32 %v279, %v289
      %308 = vst [vmem:[%s3] sm:$0xff] %v292
      %309 = vst [vmem:[%s3 + $0x8] sm:$0xff] %v293
      %310 = vst [vmem:[%s3 + $0x10] sm:$0xff] %v294
      %311 = vst [vmem:[%s3 + $0x18] sm:$0xff] %v295
      %312 = vst [vmem:[%s3 + $0x20] sm:$0xff] %v296
      %313 = vst [vmem:[%s3 + $0x28] sm:$0xff] %v297
      %314 = vst [vmem:[%s3 + $0x30] sm:$0xff] %v298
      %315 = vst [vmem:[%s3 + $0x38] sm:$0xff] %v299
      %316 = vst [vmem:[%s3 + $0x40] sm:$0xff] %v300
      %317 = vst [vmem:[%s3 + $0x48] sm:$0xff] %v301
      %318 = vst [vmem:[%s3 + $0x50] sm:$0xff] %v302
      %319 = vst [vmem:[%s3 + $0x58] sm:$0xff] %v303
      %320 = vst [vmem:[%s3 + $0x60] sm:$0xff] %v304
      %321 = vst [vmem:[%s3 + $0x68] sm:$0xff] %v305
      %322 = vst [vmem:[%s3 + $0x70] sm:$0xff] %v306
      %323 = vst [vmem:[%s3 + $0x78] sm:$0xff] %v307
    $region29: #{rnn_lm_forward.3} parent=1 // pred_fallthru
      _
    // Predicated region
    $region30: #{rnn_lm_forward.3} parent=1 // pred_check
      _
    $region31: #{rnn_lm_forward.3} parent=1 // pred_check_branch
      %325 = sbr.rel (0) target = $region33
    $region32: #{rnn_lm_forward.3} parent=1 // pred_region
      _
    $region33: #{rnn_lm_forward.3} parent=1 // pred_fallthru
      _
    // Predicated region
    $region34: #{rnn_lm_forward.3} parent=1 // pred_check
      _
    $region35: #{rnn_lm_forward.3} parent=1 // pred_check_branch
      %327 = sbr.rel (0) target = $region37
    $region36: #{rnn_lm_forward.3} parent=1 // pred_region
      _
    $region37: #{rnn_lm_forward.3} parent=1 // pred_fallthru
      _
    %328 = vsyncpa [#allocation4], 1
    %329 = vsyncpa [#allocation6], 1

// kernel: rnn_lm_forward.5
$region0: #{rnn_lm_forward.5}
  #allocation0 [shape = 'u32[]', space=smem, size = 0x4, offset = 0x4, fixed_abs, tag = 'smem constant byte address 0x4 - core index']
  #allocation1 [shape = 'u32[144,128]{1,0:T(1,128)}', space=vmem, size = 0x12000, scoped, tag = 'internal scratch']
  #allocation2 [shape = 'f32[64,256]{1,0:T(8,128)}', space=vmem, size = 0x10000, scoped, tag = 'scratch operand']
  %s0 = inlined_call_operand.vmem [shape: f32[64,256], index: 0, kind: input, shape index: {}]
  %s1 = inlined_call_operand.vmem [shape: f32[256,256], index: 1, kind: input, shape index: {}]
  %s2 = inlined_call_operand.vmem [shape: f32[1,256], index: 2, kind: input, shape index: {}]
  %s3 = inlined_call_operand.vmem [shape: f32[64,256], index: 3, kind: output, shape index: {}]
  %s4 = sld [smem:[#allocation0]]
  $region30: #{rnn_lm_forward.5} parent=0
    _
  %s6 = ssub.s32 1, %s4
  %s7 = scalar_select 0, %s6, %s4
  // Predicated region
  $region2: #{rnn_lm_forward.5} parent=0 // pred_check
    _
  $region3: #{rnn_lm_forward.5} parent=0 // pred_check_branch
    %9 = sbr.rel (0) target = $region5
  $region4: #{rnn_lm_forward.5} parent=0 // pred_region
    _
  $region5: #{rnn_lm_forward.5} parent=0 // pred_fallthru
    _
  // Predicated region
  $region6: #{rnn_lm_forward.5} parent=0 // pred_check
    _
  $region7: #{rnn_lm_forward.5} parent=0 // pred_check_branch
    %11 = sbr.rel (0) target = $region9
  $region8: #{rnn_lm_forward.5} parent=0 // pred_region
    _
  $region9: #{rnn_lm_forward.5} parent=0 // pred_fallthru
    _
  // Predicated region
  $region10: #{rnn_lm_forward.5} parent=0 // pred_check
    _
  $region11: #{rnn_lm_forward.5} parent=0 // pred_check_branch
    %13 = sbr.rel (0) target = $region13
  $region12: #{rnn_lm_forward.5} parent=0 // pred_region
    _
  $region13: #{rnn_lm_forward.5} parent=0 // pred_fallthru
    _
  %p14 = scmp.eq.s32.totalorder 0, 0
  // Predicated region
  $region14: #{rnn_lm_forward.5} parent=0 // pred_check
    %p15 = pneg %p14
  $region15: #{rnn_lm_forward.5} parent=0 // pred_check_branch
    %17 = sbr.rel (%p15) target = $region17
  $region16: #{rnn_lm_forward.5} parent=0 // pred_region
    %18 = vst [vmem:[#allocation2] sm:$0xff] 0.0
    %19 = vst [vmem:[#allocation2 + $0x8] sm:$0xff] 0.0
    %20 = vst [vmem:[#allocation2 + $0x10] sm:$0xff] 0.0
    %21 = vst [vmem:[#allocation2 + $0x18] sm:$0xff] 0.0
    %22 = vst [vmem:[#allocation2 + $0x20] sm:$0xff] 0.0
    %23 = vst [vmem:[#allocation2 + $0x28] sm:$0xff] 0.0
    %24 = vst [vmem:[#allocation2 + $0x30] sm:$0xff] 0.0
    %25 = vst [vmem:[#allocation2 + $0x38] sm:$0xff] 0.0
    %26 = vst [vmem:[#allocation2 + $0x40] sm:$0xff] 0.0
    %27 = vst [vmem:[#allocation2 + $0x48] sm:$0xff] 0.0
    %28 = vst [vmem:[#allocation2 + $0x50] sm:$0xff] 0.0
    %29 = vst [vmem:[#allocation2 + $0x58] sm:$0xff] 0.0
    %30 = vst [vmem:[#allocation2 + $0x60] sm:$0xff] 0.0
    %31 = vst [vmem:[#allocation2 + $0x68] sm:$0xff] 0.0
    %32 = vst [vmem:[#allocation2 + $0x70] sm:$0xff] 0.0
    %33 = vst [vmem:[#allocation2 + $0x78] sm:$0xff] 0.0
  $region17: #{rnn_lm_forward.5} parent=0 // pred_fallthru
    _
  %v34 = vld [vmem:[#allocation2] sm:$0xff]
  %v35 = vld [vmem:[#allocation2 + $0x8] sm:$0xff]
  %v36 = vld [vmem:[#allocation2 + $0x10] sm:$0xff]
  %v37 = vld [vmem:[#allocation2 + $0x18] sm:$0xff]
  %v38 = vld [vmem:[#allocation2 + $0x20] sm:$0xff]
  %v39 = vld [vmem:[#allocation2 + $0x28] sm:$0xff]
  %v40 = vld [vmem:[#allocation2 + $0x30] sm:$0xff]
  %v41 = vld [vmem:[#allocation2 + $0x38] sm:$0xff]
  %v42 = vld [vmem:[#allocation2 + $0x40] sm:$0xff]
  %v43 = vld [vmem:[#allocation2 + $0x48] sm:$0xff]
  %v44 = vld [vmem:[#allocation2 + $0x50] sm:$0xff]
  %v45 = vld [vmem:[#allocation2 + $0x58] sm:$0xff]
  %v46 = vld [vmem:[#allocation2 + $0x60] sm:$0xff]
  %v47 = vld [vmem:[#allocation2 + $0x68] sm:$0xff]
  %v48 = vld [vmem:[#allocation2 + $0x70] sm:$0xff]
  %v49 = vld [vmem:[#allocation2 + $0x78] sm:$0xff]
  %v50 = vld [vmem:[%s0] sm:$0xff]
  %v51 = vld [vmem:[%s0 + $0x8] sm:$0xff]
  %v52 = vld [vmem:[%s0 + $0x10] sm:$0xff]
  %v53 = vld [vmem:[%s0 + $0x18] sm:$0xff]
  %v54 = vld [vmem:[%s0 + $0x20] sm:$0xff]
  %v55 = vld [vmem:[%s0 + $0x28] sm:$0xff]
  %v56 = vld [vmem:[%s0 + $0x30] sm:$0xff]
  %v57 = vld [vmem:[%s0 + $0x38] sm:$0xff]
  %v58 = vld [vmem:[%s0 + $0x40] sm:$0xff]
  %v59 = vld [vmem:[%s0 + $0x48] sm:$0xff]
  %v60 = vld [vmem:[%s0 + $0x50] sm:$0xff]
  %v61 = vld [vmem:[%s0 + $0x58] sm:$0xff]
  %v62 = vld [vmem:[%s0 + $0x60] sm:$0xff]
  %v63 = vld [vmem:[%s0 + $0x68] sm:$0xff]
  %v64 = vld [vmem:[%s0 + $0x70] sm:$0xff]
  %v65 = vld [vmem:[%s0 + $0x78] sm:$0xff]
  %v66 = vld [vmem:[%s1] sm:$0xff]
  %v67 = vld [vmem:[%s1 + $0x8] sm:$0xff]
  %v68 = vld [vmem:[%s1 + $0x10] sm:$0xff]
  %v69 = vld [vmem:[%s1 + $0x18] sm:$0xff]
  %v70 = vld [vmem:[%s1 + $0x20] sm:$0xff]
  %v71 = vld [vmem:[%s1 + $0x28] sm:$0xff]
  %v72 = vld [vmem:[%s1 + $0x30] sm:$0xff]
  %v73 = vld [vmem:[%s1 + $0x38] sm:$0xff]
  %v74 = vld [vmem:[%s1 + $0x40] sm:$0xff]
  %v75 = vld [vmem:[%s1 + $0x48] sm:$0xff]
  %v76 = vld [vmem:[%s1 + $0x50] sm:$0xff]
  %v77 = vld [vmem:[%s1 + $0x58] sm:$0xff]
  %v78 = vld [vmem:[%s1 + $0x60] sm:$0xff]
  %v79 = vld [vmem:[%s1 + $0x68] sm:$0xff]
  %v80 = vld [vmem:[%s1 + $0x70] sm:$0xff]
  %v81 = vld [vmem:[%s1 + $0x78] sm:$0xff]
  %v82 = vld [vmem:[%s1 + $0x80] sm:$0xff]
  %v83 = vld [vmem:[%s1 + $0x88] sm:$0xff]
  %v84 = vld [vmem:[%s1 + $0x90] sm:$0xff]
  %v85 = vld [vmem:[%s1 + $0x98] sm:$0xff]
  %v86 = vld [vmem:[%s1 + $0xa0] sm:$0xff]
  %v87 = vld [vmem:[%s1 + $0xa8] sm:$0xff]
  %v88 = vld [vmem:[%s1 + $0xb0] sm:$0xff]
  %v89 = vld [vmem:[%s1 + $0xb8] sm:$0xff]
  %v90 = vld [vmem:[%s1 + $0xc0] sm:$0xff]
  %v91 = vld [vmem:[%s1 + $0xc8] sm:$0xff]
  %v92 = vld [vmem:[%s1 + $0xd0] sm:$0xff]
  %v93 = vld [vmem:[%s1 + $0xd8] sm:$0xff]
  %v94 = vld [vmem:[%s1 + $0xe0] sm:$0xff]
  %v95 = vld [vmem:[%s1 + $0xe8] sm:$0xff]
  %v96 = vld [vmem:[%s1 + $0xf0] sm:$0xff]
  %v97 = vld [vmem:[%s1 + $0xf8] sm:$0xff]
  %v98 = vld [vmem:[%s1 + $0x100] sm:$0xff]
  %v99 = vld [vmem:[%s1 + $0x108] sm:$0xff]
  %v100 = vld [vmem:[%s1 + $0x110] sm:$0xff]
  %v101 = vld [vmem:[%s1 + $0x118] sm:$0xff]
  %v102 = vld [vmem:[%s1 + $0x120] sm:$0xff]
  %v103 = vld [vmem:[%s1 + $0x128] sm:$0xff]
  %v104 = vld [vmem:[%s1 + $0x130] sm:$0xff]
  %v105 = vld [vmem:[%s1 + $0x138] sm:$0xff]
  %v106 = vld [vmem:[%s1 + $0x140] sm:$0xff]
  %v107 = vld [vmem:[%s1 + $0x148] sm:$0xff]
  %v108 = vld [vmem:[%s1 + $0x150] sm:$0xff]
  %v109 = vld [vmem:[%s1 + $0x158] sm:$0xff]
  %v110 = vld [vmem:[%s1 + $0x160] sm:$0xff]
  %v111 = vld [vmem:[%s1 + $0x168] sm:$0xff]
  %v112 = vld [vmem:[%s1 + $0x170] sm:$0xff]
  %v113 = vld [vmem:[%s1 + $0x178] sm:$0xff]
  %v114 = vld [vmem:[%s1 + $0x180] sm:$0xff]
  %v115 = vld [vmem:[%s1 + $0x188] sm:$0xff]
  %v116 = vld [vmem:[%s1 + $0x190] sm:$0xff]
  %v117 = vld [vmem:[%s1 + $0x198] sm:$0xff]
  %v118 = vld [vmem:[%s1 + $0x1a0] sm:$0xff]
  %v119 = vld [vmem:[%s1 + $0x1a8] sm:$0xff]
  %v120 = vld [vmem:[%s1 + $0x1b0] sm:$0xff]
  %v121 = vld [vmem:[%s1 + $0x1b8] sm:$0xff]
  %v122 = vld [vmem:[%s1 + $0x1c0] sm:$0xff]
  %v123 = vld [vmem:[%s1 + $0x1c8] sm:$0xff]
  %v124 = vld [vmem:[%s1 + $0x1d0] sm:$0xff]
  %v125 = vld [vmem:[%s1 + $0x1d8] sm:$0xff]
  %v126 = vld [vmem:[%s1 + $0x1e0] sm:$0xff]
  %v127 = vld [vmem:[%s1 + $0x1e8] sm:$0xff]
  %v128 = vld [vmem:[%s1 + $0x1f0] sm:$0xff]
  %v129 = vld [vmem:[%s1 + $0x1f8] sm:$0xff]
  %130 = vmatprep.subr.mxu0 %v97
  %131 = vmatpush1.msra.mxu0 %v96
  %132 = vmatprep.subr.mxu0 %v95
  %133 = vmatpush1.msra.mxu0 %v94
  %134 = vmatprep.subr.mxu0 %v93
  %135 = vmatpush1.msra.mxu0 %v92
  %136 = vmatprep.subr.mxu0 %v91
  %137 = vmatpush1.msra.mxu0 %v90
  %138 = vmatprep.subr.mxu0 %v89
  %139 = vmatpush1.msra.mxu0 %v88
  %140 = vmatprep.subr.mxu0 %v87
  %141 = vmatpush1.msra.mxu0 %v86
  %142 = vmatprep.subr.mxu0 %v85
  %143 = vmatpush1.msra.mxu0 %v84
  %144 = vmatprep.subr.mxu0 %v83
  %145 = vmatpush1.msra.mxu0 %v82
  %146 = vmatprep.subr.mxu0 %v81
  %147 = vmatpush1.msra.mxu0 %v80
  %148 = vmatprep.subr.mxu0 %v79
  %149 = vmatpush1.msra.mxu0 %v78
  %150 = vmatprep.subr.mxu0 %v77
  %151 = vmatpush1.msra.mxu0 %v76
  %152 = vmatprep.subr.mxu0 %v75
  %153 = vmatpush1.msra.mxu0 %v74
  %154 = vmatprep.subr.mxu0 %v73
  %155 = vmatpush1.msra.mxu0 %v72
  %156 = vmatprep.subr.mxu0 %v71
  %157 = vmatpush1.msra.mxu0 %v70
  %158 = vmatprep.subr.mxu0 %v69
  %159 = vmatpush1.msra.mxu0 %v68
  %160 = vmatprep.subr.mxu0 %v67
  %161 = vmatpush1.msra.mxu0 %v66
  %162 = vmatprep.subr.mxu0 %v129
  %163 = vmatpush2.msra.mxu0 %v128
  %164 = vmatprep.subr.mxu0 %v127
  %165 = vmatpush2.msra.mxu0 %v126
  %166 = vmatprep.subr.mxu0 %v125
  %167 = vmatpush2.msra.mxu0 %v124
  %168 = vmatprep.subr.mxu0 %v123
  %169 = vmatpush2.msra.mxu0 %v122
  %170 = vmatprep.subr.mxu0 %v121
  %171 = vmatpush2.msra.mxu0 %v120
  %172 = vmatprep.subr.mxu0 %v119
  %173 = vmatpush2.msra.mxu0 %v118
  %174 = vmatprep.subr.mxu0 %v117
  %175 = vmatpush2.msra.mxu0 %v116
  %176 = vmatprep.subr.mxu0 %v115
  %177 = vmatpush2.msra.mxu0 %v114
  %178 = vmatprep.subr.mxu0 %v113
  %179 = vmatpush2.msra.mxu0 %v112
  %180 = vmatprep.subr.mxu0 %v111
  %181 = vmatpush2.msra.mxu0 %v110
  %182 = vmatprep.subr.mxu0 %v109
  %183 = vmatpush2.msra.mxu0 %v108
  %184 = vmatprep.subr.mxu0 %v107
  %185 = vmatpush2.msra.mxu0 %v106
  %186 = vmatprep.subr.mxu0 %v105
  %187 = vmatpush2.msra.mxu0 %v104
  %188 = vmatprep.subr.mxu0 %v103
  %189 = vmatpush2.msra.mxu0 %v102
  %190 = vmatprep.subr.mxu0 %v101
  %191 = vmatpush2.msra.mxu0 %v100
  %192 = vmatprep.subr.mxu0 %v99
  %193 = vmatpush2.msra.mxu0 %v98
  %194 = vmatprep.mubr.f32.mxu0 %v51
  %195 = vmatmul.mubr.f32.gmra.mxu0 %v50
  %v196 = vpop.f32.mrf.mxu0
  %v197 = vadd.f32 0.0, %v196
  %v198 = vpop.f32.mrf.mxu0
  %v199 = vadd.f32 0.0, %v198
  %200 = vmatprep.mubr.f32.mxu0 %v53
  %201 = vmatmul.mubr.f32.gmra.mxu0 %v52
  %v202 = vpop.f32.mrf.mxu0
  %v203 = vadd.f32 0.0, %v202
  %v204 = vpop.f32.mrf.mxu0
  %v205 = vadd.f32 0.0, %v204
  %206 = vmatprep.mubr.f32.mxu0 %v55
  %207 = vmatmul.mubr.f32.gmra.mxu0 %v54
  %v208 = vpop.f32.mrf.mxu0
  %v209 = vadd.f32 0.0, %v208
  %v210 = vpop.f32.mrf.mxu0
  %v211 = vadd.f32 0.0, %v210
  %212 = vmatprep.mubr.f32.mxu0 %v57
  %213 = vmatmul.mubr.f32.gmra.mxu0 %v56
  %v214 = vpop.f32.mrf.mxu0
  %v215 = vadd.f32 0.0, %v214
  %v216 = vpop.f32.mrf.mxu0
  %v217 = vadd.f32 0.0, %v216
  %218 = vmatprep.mubr.f32.mxu0 %v59
  %219 = vmatmul.mubr.f32.gmra.mxu0 %v58
  %v220 = vpop.f32.mrf.mxu0
  %v221 = vadd.f32 0.0, %v220
  %v222 = vpop.f32.mrf.mxu0
  %v223 = vadd.f32 0.0, %v222
  %224 = vmatprep.mubr.f32.mxu0 %v61
  %225 = vmatmul.mubr.f32.gmra.mxu0 %v60
  %v226 = vpop.f32.mrf.mxu0
  %v227 = vadd.f32 0.0, %v226
  %v228 = vpop.f32.mrf.mxu0
  %v229 = vadd.f32 0.0, %v228
  %230 = vmatprep.mubr.f32.mxu0 %v63
  %231 = vmatmul.mubr.f32.gmra.mxu0 %v62
  %v232 = vpop.f32.mrf.mxu0
  %v233 = vadd.f32 0.0, %v232
  %v234 = vpop.f32.mrf.mxu0
  %v235 = vadd.f32 0.0, %v234
  %236 = vmatprep.mubr.f32.mxu0 %v65
  %237 = vmatmul.mubr.f32.gmra.mxu0 %v64
  %v238 = vpop.f32.mrf.mxu0
  %v239 = vadd.f32 0.0, %v238
  %v240 = vpop.f32.mrf.mxu0
  %v241 = vadd.f32 0.0, %v240
  %242 = vdwg.mxu0
  %v243 = vadd.f32 %v34, %v197
  %v244 = vadd.f32 %v35, %v199
  %v245 = vadd.f32 %v36, %v203
  %v246 = vadd.f32 %v37, %v205
  %v247 = vadd.f32 %v38, %v209
  %v248 = vadd.f32 %v39, %v211
  %v249 = vadd.f32 %v40, %v215
  %v250 = vadd.f32 %v41, %v217
  %v251 = vadd.f32 %v42, %v221
  %v252 = vadd.f32 %v43, %v223
  %v253 = vadd.f32 %v44, %v227
  %v254 = vadd.f32 %v45, %v229
  %v255 = vadd.f32 %v46, %v233
  %v256 = vadd.f32 %v47, %v235
  %v257 = vadd.f32 %v48, %v239
  %v258 = vadd.f32 %v49, %v241
  %259 = vst [vmem:[#allocation2] sm:$0xff] %v243
  %260 = vst [vmem:[#allocation2 + $0x8] sm:$0xff] %v244
  %261 = vst [vmem:[#allocation2 + $0x10] sm:$0xff] %v245
  %262 = vst [vmem:[#allocation2 + $0x18] sm:$0xff] %v246
  %263 = vst [vmem:[#allocation2 + $0x20] sm:$0xff] %v247
  %264 = vst [vmem:[#allocation2 + $0x28] sm:$0xff] %v248
  %265 = vst [vmem:[#allocation2 + $0x30] sm:$0xff] %v249
  %266 = vst [vmem:[#allocation2 + $0x38] sm:$0xff] %v250
  %267 = vst [vmem:[#allocation2 + $0x40] sm:$0xff] %v251
  %268 = vst [vmem:[#allocation2 + $0x48] sm:$0xff] %v252
  %269 = vst [vmem:[#allocation2 + $0x50] sm:$0xff] %v253
  %270 = vst [vmem:[#allocation2 + $0x58] sm:$0xff] %v254
  %271 = vst [vmem:[#allocation2 + $0x60] sm:$0xff] %v255
  %272 = vst [vmem:[#allocation2 + $0x68] sm:$0xff] %v256
  %273 = vst [vmem:[#allocation2 + $0x70] sm:$0xff] %v257
  %274 = vst [vmem:[#allocation2 + $0x78] sm:$0xff] %v258
  // Predicated region
  $region18: #{rnn_lm_forward.5} parent=0 // pred_check
    %p275 = pneg %p14
  $region19: #{rnn_lm_forward.5} parent=0 // pred_check_branch
    %277 = sbr.rel (%p275) target = $region21
  $region20: #{rnn_lm_forward.5} parent=0 // pred_region
    %v278 = vld [vmem:[#allocation2] sm:$0xff]
    %v279 = vld [vmem:[#allocation2 + $0x8] sm:$0xff]
    %v280 = vld [vmem:[#allocation2 + $0x10] sm:$0xff]
    %v281 = vld [vmem:[#allocation2 + $0x18] sm:$0xff]
    %v282 = vld [vmem:[#allocation2 + $0x20] sm:$0xff]
    %v283 = vld [vmem:[#allocation2 + $0x28] sm:$0xff]
    %v284 = vld [vmem:[#allocation2 + $0x30] sm:$0xff]
    %v285 = vld [vmem:[#allocation2 + $0x38] sm:$0xff]
    %v286 = vld [vmem:[#allocation2 + $0x40] sm:$0xff]
    %v287 = vld [vmem:[#allocation2 + $0x48] sm:$0xff]
    %v288 = vld [vmem:[#allocation2 + $0x50] sm:$0xff]
    %v289 = vld [vmem:[#allocation2 + $0x58] sm:$0xff]
    %v290 = vld [vmem:[#allocation2 + $0x60] sm:$0xff]
    %v291 = vld [vmem:[#allocation2 + $0x68] sm:$0xff]
    %v292 = vld [vmem:[#allocation2 + $0x70] sm:$0xff]
    %v293 = vld [vmem:[#allocation2 + $0x78] sm:$0xff]
    %v294 = vld [vmem:[%s2] sm:$0x3]
    %v296 = vlaneseq
    %v297 = vshrl.u32 %v296, 7
    %v298 = vsub.s32 0, %v297
    %v299 = vrot.slane %v294, %v298
    %v300 = vlaneseq
    %v301 = vshrl.u32 %v300, 7
    %v302 = vsub.s32 1, %v301
    %v303 = vrot.slane %v294, %v302
    %v306 = vadd.f32 %v278, %v299
    %v307 = vadd.f32 %v279, %v303
    %v308 = vadd.f32 %v280, %v299
    %v309 = vadd.f32 %v281, %v303
    %v310 = vadd.f32 %v282, %v299
    %v311 = vadd.f32 %v283, %v303
    %v312 = vadd.f32 %v284, %v299
    %v313 = vadd.f32 %v285, %v303
    %v314 = vadd.f32 %v286, %v299
    %v315 = vadd.f32 %v287, %v303
    %v316 = vadd.f32 %v288, %v299
    %v317 = vadd.f32 %v289, %v303
    %v318 = vadd.f32 %v290, %v299
    %v319 = vadd.f32 %v291, %v303
    %v320 = vadd.f32 %v292, %v299
    %v321 = vadd.f32 %v293, %v303
    %322 = vst [vmem:[%s3] sm:$0xff] %v306
    %323 = vst [vmem:[%s3 + $0x8] sm:$0xff] %v307
    %324 = vst [vmem:[%s3 + $0x10] sm:$0xff] %v308
    %325 = vst [vmem:[%s3 + $0x18] sm:$0xff] %v309
    %326 = vst [vmem:[%s3 + $0x20] sm:$0xff] %v310
    %327 = vst [vmem:[%s3 + $0x28] sm:$0xff] %v311
    %328 = vst [vmem:[%s3 + $0x30] sm:$0xff] %v312
    %329 = vst [vmem:[%s3 + $0x38] sm:$0xff] %v313
    %330 = vst [vmem:[%s3 + $0x40] sm:$0xff] %v314
    %331 = vst [vmem:[%s3 + $0x48] sm:$0xff] %v315
    %332 = vst [vmem:[%s3 + $0x50] sm:$0xff] %v316
    %333 = vst [vmem:[%s3 + $0x58] sm:$0xff] %v317
    %334 = vst [vmem:[%s3 + $0x60] sm:$0xff] %v318
    %335 = vst [vmem:[%s3 + $0x68] sm:$0xff] %v319
    %336 = vst [vmem:[%s3 + $0x70] sm:$0xff] %v320
    %337 = vst [vmem:[%s3 + $0x78] sm:$0xff] %v321
  $region21: #{rnn_lm_forward.5} parent=0 // pred_fallthru
    _
  // Predicated region
  $region22: #{rnn_lm_forward.5} parent=0 // pred_check
    _
  $region23: #{rnn_lm_forward.5} parent=0 // pred_check_branch
    %339 = sbr.rel (0) target = $region25
  $region24: #{rnn_lm_forward.5} parent=0 // pred_region
    _
  $region25: #{rnn_lm_forward.5} parent=0 // pred_fallthru
    _
  // Predicated region
  $region26: #{rnn_lm_forward.5} parent=0 // pred_check
    _
  $region27: #{rnn_lm_forward.5} parent=0 // pred_check_branch
    %341 = sbr.rel (0) target = $region29
  $region28: #{rnn_lm_forward.5} parent=0 // pred_region
    _
  $region29: #{rnn_lm_forward.5} parent=0 // pred_fallthru
    _

// kernel: rnn_lm_forward.4
$region0: #{rnn_lm_forward.4}
  #allocation0 [shape = 'u32[]', space=smem, size = 0x4, offset = 0x4, fixed_abs, tag = 'smem constant byte address 0x4 - core index']
  #allocation1 [shape = 'u32[144,128]{1,0:T(1,128)}', space=vmem, size = 0x12000, scoped, tag = 'internal scratch']
  #allocation2 [shape = 'f32[8,256]{1,0:T(8,128)}', space=vmem, size = 0x2000, scoped, tag = 'scratch operand']
  %s0 = inlined_call_operand.vmem [shape: f32[8,8,256], index: 0, kind: input, shape index: {}]
  %s1 = inlined_call_operand.vmem [shape: f32[256,256], index: 1, kind: input, shape index: {}]
  %s2 = inlined_call_operand.vmem [shape: f32[8,8,256], index: 2, kind: output, shape index: {0}]
  %s3 = inlined_call_operand.vmem [shape: f32[8,256], index: 3, kind: output, shape index: {1}]
  %4 = xla_tuple %s2, %s3
  %s5 = sld [smem:[#allocation0]]
  $region34: #{rnn_lm_forward.4} parent=0
    _
  %s7 = ssub.s32 1, %s5
  %s8 = scalar_select 0, %s7, %s5
  // Predicated region
  $region2: #{rnn_lm_forward.4} parent=0 // pred_check
    _
  $region3: #{rnn_lm_forward.4} parent=0 // pred_check_branch
    %10 = sbr.rel (0) target = $region5
  $region4: #{rnn_lm_forward.4} parent=0 // pred_region
    _
  $region5: #{rnn_lm_forward.4} parent=0 // pred_fallthru
    _
  // Predicated region
  $region6: #{rnn_lm_forward.4} parent=0 // pred_check
    _
  $region7: #{rnn_lm_forward.4} parent=0 // pred_check_branch
    %12 = sbr.rel (0) target = $region9
  $region8: #{rnn_lm_forward.4} parent=0 // pred_region
    _
  $region9: #{rnn_lm_forward.4} parent=0 // pred_fallthru
    _
  %p13 = scmp.eq.s32.totalorder 0, 0
  // Predicated region
  $region10: #{rnn_lm_forward.4} parent=0 // pred_check
    %p14 = pneg %p13
  $region11: #{rnn_lm_forward.4} parent=0 // pred_check_branch
    %16 = sbr.rel (%p14) target = $region13
  $region12: #{rnn_lm_forward.4} parent=0 // pred_region
    %17 = vst [vmem:[#allocation2] sm:$0xff] 0.0
    %18 = vst [vmem:[#allocation2 + $0x8] sm:$0xff] 0.0
  $region13: #{rnn_lm_forward.4} parent=0 // pred_fallthru
    _
  %v19 = vld [vmem:[%s1] sm:$0xff]
  %v20 = vld [vmem:[%s1 + $0x8] sm:$0xff]
  %v21 = vld [vmem:[%s1 + $0x10] sm:$0xff]
  %v22 = vld [vmem:[%s1 + $0x18] sm:$0xff]
  %v23 = vld [vmem:[%s1 + $0x20] sm:$0xff]
  %v24 = vld [vmem:[%s1 + $0x28] sm:$0xff]
  %v25 = vld [vmem:[%s1 + $0x30] sm:$0xff]
  %v26 = vld [vmem:[%s1 + $0x38] sm:$0xff]
  %v27 = vld [vmem:[%s1 + $0x40] sm:$0xff]
  %v28 = vld [vmem:[%s1 + $0x48] sm:$0xff]
  %v29 = vld [vmem:[%s1 + $0x50] sm:$0xff]
  %v30 = vld [vmem:[%s1 + $0x58] sm:$0xff]
  %v31 = vld [vmem:[%s1 + $0x60] sm:$0xff]
  %v32 = vld [vmem:[%s1 + $0x68] sm:$0xff]
  %v33 = vld [vmem:[%s1 + $0x70] sm:$0xff]
  %v34 = vld [vmem:[%s1 + $0x78] sm:$0xff]
  %v35 = vld [vmem:[%s1 + $0x80] sm:$0xff]
  %v36 = vld [vmem:[%s1 + $0x88] sm:$0xff]
  %v37 = vld [vmem:[%s1 + $0x90] sm:$0xff]
  %v38 = vld [vmem:[%s1 + $0x98] sm:$0xff]
  %v39 = vld [vmem:[%s1 + $0xa0] sm:$0xff]
  %v40 = vld [vmem:[%s1 + $0xa8] sm:$0xff]
  %v41 = vld [vmem:[%s1 + $0xb0] sm:$0xff]
  %v42 = vld [vmem:[%s1 + $0xb8] sm:$0xff]
  %v43 = vld [vmem:[%s1 + $0xc0] sm:$0xff]
  %v44 = vld [vmem:[%s1 + $0xc8] sm:$0xff]
  %v45 = vld [vmem:[%s1 + $0xd0] sm:$0xff]
  %v46 = vld [vmem:[%s1 + $0xd8] sm:$0xff]
  %v47 = vld [vmem:[%s1 + $0xe0] sm:$0xff]
  %v48 = vld [vmem:[%s1 + $0xe8] sm:$0xff]
  %v49 = vld [vmem:[%s1 + $0xf0] sm:$0xff]
  %v50 = vld [vmem:[%s1 + $0xf8] sm:$0xff]
  %v51 = vld [vmem:[%s1 + $0x100] sm:$0xff]
  %v52 = vld [vmem:[%s1 + $0x108] sm:$0xff]
  %v53 = vld [vmem:[%s1 + $0x110] sm:$0xff]
  %v54 = vld [vmem:[%s1 + $0x118] sm:$0xff]
  %v55 = vld [vmem:[%s1 + $0x120] sm:$0xff]
  %v56 = vld [vmem:[%s1 + $0x128] sm:$0xff]
  %v57 = vld [vmem:[%s1 + $0x130] sm:$0xff]
  %v58 = vld [vmem:[%s1 + $0x138] sm:$0xff]
  %v59 = vld [vmem:[%s1 + $0x140] sm:$0xff]
  %v60 = vld [vmem:[%s1 + $0x148] sm:$0xff]
  %v61 = vld [vmem:[%s1 + $0x150] sm:$0xff]
  %v62 = vld [vmem:[%s1 + $0x158] sm:$0xff]
  %v63 = vld [vmem:[%s1 + $0x160] sm:$0xff]
  %v64 = vld [vmem:[%s1 + $0x168] sm:$0xff]
  %v65 = vld [vmem:[%s1 + $0x170] sm:$0xff]
  %v66 = vld [vmem:[%s1 + $0x178] sm:$0xff]
  %v67 = vld [vmem:[%s1 + $0x180] sm:$0xff]
  %v68 = vld [vmem:[%s1 + $0x188] sm:$0xff]
  %v69 = vld [vmem:[%s1 + $0x190] sm:$0xff]
  %v70 = vld [vmem:[%s1 + $0x198] sm:$0xff]
  %v71 = vld [vmem:[%s1 + $0x1a0] sm:$0xff]
  %v72 = vld [vmem:[%s1 + $0x1a8] sm:$0xff]
  %v73 = vld [vmem:[%s1 + $0x1b0] sm:$0xff]
  %v74 = vld [vmem:[%s1 + $0x1b8] sm:$0xff]
  %v75 = vld [vmem:[%s1 + $0x1c0] sm:$0xff]
  %v76 = vld [vmem:[%s1 + $0x1c8] sm:$0xff]
  %v77 = vld [vmem:[%s1 + $0x1d0] sm:$0xff]
  %v78 = vld [vmem:[%s1 + $0x1d8] sm:$0xff]
  %v79 = vld [vmem:[%s1 + $0x1e0] sm:$0xff]
  %v80 = vld [vmem:[%s1 + $0x1e8] sm:$0xff]
  %v81 = vld [vmem:[%s1 + $0x1f0] sm:$0xff]
  %v82 = vld [vmem:[%s1 + $0x1f8] sm:$0xff]
  %v83 = vld [vmem:[#allocation2] sm:$0xff]
  %v84 = vld [vmem:[#allocation2 + $0x8] sm:$0xff]
  %v85 = vld [vmem:[%s0] sm:$0xff]
  %v86 = vld [vmem:[%s0 + $0x8] sm:$0xff]
  %87 = vmatprep.subr.mxu0 %v50
  %88 = vmatpush1.msra.mxu0 %v49
  %89 = vmatprep.subr.mxu0 %v48
  %90 = vmatpush1.msra.mxu0 %v47
  %91 = vmatprep.subr.mxu0 %v46
  %92 = vmatpush1.msra.mxu0 %v45
  %93 = vmatprep.subr.mxu0 %v44
  %94 = vmatpush1.msra.mxu0 %v43
  %95 = vmatprep.subr.mxu0 %v42
  %96 = vmatpush1.msra.mxu0 %v41
  %97 = vmatprep.subr.mxu0 %v40
  %98 = vmatpush1.msra.mxu0 %v39
  %99 = vmatprep.subr.mxu0 %v38
  %100 = vmatpush1.msra.mxu0 %v37
  %101 = vmatprep.subr.mxu0 %v36
  %102 = vmatpush1.msra.mxu0 %v35
  %103 = vmatprep.subr.mxu0 %v34
  %104 = vmatpush1.msra.mxu0 %v33
  %105 = vmatprep.subr.mxu0 %v32
  %106 = vmatpush1.msra.mxu0 %v31
  %107 = vmatprep.subr.mxu0 %v30
  %108 = vmatpush1.msra.mxu0 %v29
  %109 = vmatprep.subr.mxu0 %v28
  %110 = vmatpush1.msra.mxu0 %v27
  %111 = vmatprep.subr.mxu0 %v26
  %112 = vmatpush1.msra.mxu0 %v25
  %113 = vmatprep.subr.mxu0 %v24
  %114 = vmatpush1.msra.mxu0 %v23
  %115 = vmatprep.subr.mxu0 %v22
  %116 = vmatpush1.msra.mxu0 %v21
  %117 = vmatprep.subr.mxu0 %v20
  %118 = vmatpush1.msra.mxu0 %v19
  %119 = vmatprep.subr.mxu0 %v82
  %120 = vmatpush2.msra.mxu0 %v81
  %121 = vmatprep.subr.mxu0 %v80
  %122 = vmatpush2.msra.mxu0 %v79
  %123 = vmatprep.subr.mxu0 %v78
  %124 = vmatpush2.msra.mxu0 %v77
  %125 = vmatprep.subr.mxu0 %v76
  %126 = vmatpush2.msra.mxu0 %v75
  %127 = vmatprep.subr.mxu0 %v74
  %128 = vmatpush2.msra.mxu0 %v73
  %129 = vmatprep.subr.mxu0 %v72
  %130 = vmatpush2.msra.mxu0 %v71
  %131 = vmatprep.subr.mxu0 %v70
  %132 = vmatpush2.msra.mxu0 %v69
  %133 = vmatprep.subr.mxu0 %v68
  %134 = vmatpush2.msra.mxu0 %v67
  %135 = vmatprep.subr.mxu0 %v66
  %136 = vmatpush2.msra.mxu0 %v65
  %137 = vmatprep.subr.mxu0 %v64
  %138 = vmatpush2.msra.mxu0 %v63
  %139 = vmatprep.subr.mxu0 %v62
  %140 = vmatpush2.msra.mxu0 %v61
  %141 = vmatprep.subr.mxu0 %v60
  %142 = vmatpush2.msra.mxu0 %v59
  %143 = vmatprep.subr.mxu0 %v58
  %144 = vmatpush2.msra.mxu0 %v57
  %145 = vmatprep.subr.mxu0 %v56
  %146 = vmatpush2.msra.mxu0 %v55
  %147 = vmatprep.subr.mxu0 %v54
  %148 = vmatpush2.msra.mxu0 %v53
  %149 = vmatprep.subr.mxu0 %v52
  %150 = vmatpush2.msra.mxu0 %v51
  %151 = vmatprep.mubr.f32.mxu0 %v84
  %152 = vmatmul.mubr.f32.gmra.mxu0 %v83
  %v153 = vpop.f32.mrf.mxu0
  %v154 = vadd.f32 0.0, %v153
  %v155 = vpop.f32.mrf.mxu0
  %v156 = vadd.f32 0.0, %v155
  %157 = vdwg.mxu0
  %v158 = vadd.f32 %v85, %v154
  %v159 = vadd.f32 %v86, %v156
  %v160 = vtanh.pop %v158
  %v161 = vtanh.pop %v159
  %162 = vst [vmem:[%s2] sm:$0xff] %v160
  %163 = vst [vmem:[%s2 + $0x8] sm:$0xff] %v161
  %s164 = scalar_lea.vmem %s0, 16
  %v165 = vld [vmem:[%s164] sm:$0xff]
  %v166 = vld [vmem:[%s164 + $0x8] sm:$0xff]
  %167 = vmatprep.subr.mxu0 %v50
  %168 = vmatpush1.msra.mxu0 %v49
  %169 = vmatprep.subr.mxu0 %v48
  %170 = vmatpush1.msra.mxu0 %v47
  %171 = vmatprep.subr.mxu0 %v46
  %172 = vmatpush1.msra.mxu0 %v45
  %173 = vmatprep.subr.mxu0 %v44
  %174 = vmatpush1.msra.mxu0 %v43
  %175 = vmatprep.subr.mxu0 %v42
  %176 = vmatpush1.msra.mxu0 %v41
  %177 = vmatprep.subr.mxu0 %v40
  %178 = vmatpush1.msra.mxu0 %v39
  %179 = vmatprep.subr.mxu0 %v38
  %180 = vmatpush1.msra.mxu0 %v37
  %181 = vmatprep.subr.mxu0 %v36
  %182 = vmatpush1.msra.mxu0 %v35
  %183 = vmatprep.subr.mxu0 %v34
  %184 = vmatpush1.msra.mxu0 %v33
  %185 = vmatprep.subr.mxu0 %v32
  %186 = vmatpush1.msra.mxu0 %v31
  %187 = vmatprep.subr.mxu0 %v30
  %188 = vmatpush1.msra.mxu0 %v29
  %189 = vmatprep.subr.mxu0 %v28
  %190 = vmatpush1.msra.mxu0 %v27
  %191 = vmatprep.subr.mxu0 %v26
  %192 = vmatpush1.msra.mxu0 %v25
  %193 = vmatprep.subr.mxu0 %v24
  %194 = vmatpush1.msra.mxu0 %v23
  %195 = vmatprep.subr.mxu0 %v22
  %196 = vmatpush1.msra.mxu0 %v21
  %197 = vmatprep.subr.mxu0 %v20
  %198 = vmatpush1.msra.mxu0 %v19
  %199 = vmatprep.subr.mxu0 %v82
  %200 = vmatpush2.msra.mxu0 %v81
  %201 = vmatprep.subr.mxu0 %v80
  %202 = vmatpush2.msra.mxu0 %v79
  %203 = vmatprep.subr.mxu0 %v78
  %204 = vmatpush2.msra.mxu0 %v77
  %205 = vmatprep.subr.mxu0 %v76
  %206 = vmatpush2.msra.mxu0 %v75
  %207 = vmatprep.subr.mxu0 %v74
  %208 = vmatpush2.msra.mxu0 %v73
  %209 = vmatprep.subr.mxu0 %v72
  %210 = vmatpush2.msra.mxu0 %v71
  %211 = vmatprep.subr.mxu0 %v70
  %212 = vmatpush2.msra.mxu0 %v69
  %213 = vmatprep.subr.mxu0 %v68
  %214 = vmatpush2.msra.mxu0 %v67
  %215 = vmatprep.subr.mxu0 %v66
  %216 = vmatpush2.msra.mxu0 %v65
  %217 = vmatprep.subr.mxu0 %v64
  %218 = vmatpush2.msra.mxu0 %v63
  %219 = vmatprep.subr.mxu0 %v62
  %220 = vmatpush2.msra.mxu0 %v61
  %221 = vmatprep.subr.mxu0 %v60
  %222 = vmatpush2.msra.mxu0 %v59
  %223 = vmatprep.subr.mxu0 %v58
  %224 = vmatpush2.msra.mxu0 %v57
  %225 = vmatprep.subr.mxu0 %v56
  %226 = vmatpush2.msra.mxu0 %v55
  %227 = vmatprep.subr.mxu0 %v54
  %228 = vmatpush2.msra.mxu0 %v53
  %229 = vmatprep.subr.mxu0 %v52
  %230 = vmatpush2.msra.mxu0 %v51
  %231 = vmatprep.mubr.f32.mxu0 %v161
  %232 = vmatmul.mubr.f32.gmra.mxu0 %v160
  %v233 = vpop.f32.mrf.mxu0
  %v234 = vadd.f32 0.0, %v233
  %v235 = vpop.f32.mrf.mxu0
  %v236 = vadd.f32 0.0, %v235
  %237 = vdwg.mxu0
  %v238 = vadd.f32 %v165, %v234
  %v239 = vadd.f32 %v166, %v236
  %v240 = vtanh.pop %v238
  %v241 = vtanh.pop %v239
  %s242 = scalar_lea.vmem %s2, 16
  %243 = vst [vmem:[%s242] sm:$0xff] %v240
  %244 = vst [vmem:[%s242 + $0x8] sm:$0xff] %v241
  %s245 = scalar_lea.vmem %s0, 32
  %v246 = vld [vmem:[%s245] sm:$0xff]
  %v247 = vld [vmem:[%s245 + $0x8] sm:$0xff]
  %248 = vmatprep.subr.mxu0 %v50
  %249 = vmatpush1.msra.mxu0 %v49
  %250 = vmatprep.subr.mxu0 %v48
  %251 = vmatpush1.msra.mxu0 %v47
  %252 = vmatprep.subr.mxu0 %v46
  %253 = vmatpush1.msra.mxu0 %v45
  %254 = vmatprep.subr.mxu0 %v44
  %255 = vmatpush1.msra.mxu0 %v43
  %256 = vmatprep.subr.mxu0 %v42
  %257 = vmatpush1.msra.mxu0 %v41
  %258 = vmatprep.subr.mxu0 %v40
  %259 = vmatpush1.msra.mxu0 %v39
  %260 = vmatprep.subr.mxu0 %v38
  %261 = vmatpush1.msra.mxu0 %v37
  %262 = vmatprep.subr.mxu0 %v36
  %263 = vmatpush1.msra.mxu0 %v35
  %264 = vmatprep.subr.mxu0 %v34
  %265 = vmatpush1.msra.mxu0 %v33
  %266 = vmatprep.subr.mxu0 %v32
  %267 = vmatpush1.msra.mxu0 %v31
  %268 = vmatprep.subr.mxu0 %v30
  %269 = vmatpush1.msra.mxu0 %v29
  %270 = vmatprep.subr.mxu0 %v28
  %271 = vmatpush1.msra.mxu0 %v27
  %272 = vmatprep.subr.mxu0 %v26
  %273 = vmatpush1.msra.mxu0 %v25
  %274 = vmatprep.subr.mxu0 %v24
  %275 = vmatpush1.msra.mxu0 %v23
  %276 = vmatprep.subr.mxu0 %v22
  %277 = vmatpush1.msra.mxu0 %v21
  %278 = vmatprep.subr.mxu0 %v20
  %279 = vmatpush1.msra.mxu0 %v19
  %280 = vmatprep.subr.mxu0 %v82
  %281 = vmatpush2.msra.mxu0 %v81
  %282 = vmatprep.subr.mxu0 %v80
  %283 = vmatpush2.msra.mxu0 %v79
  %284 = vmatprep.subr.mxu0 %v78
  %285 = vmatpush2.msra.mxu0 %v77
  %286 = vmatprep.subr.mxu0 %v76
  %287 = vmatpush2.msra.mxu0 %v75
  %288 = vmatprep.subr.mxu0 %v74
  %289 = vmatpush2.msra.mxu0 %v73
  %290 = vmatprep.subr.mxu0 %v72
  %291 = vmatpush2.msra.mxu0 %v71
  %292 = vmatprep.subr.mxu0 %v70
  %293 = vmatpush2.msra.mxu0 %v69
  %294 = vmatprep.subr.mxu0 %v68
  %295 = vmatpush2.msra.mxu0 %v67
  %296 = vmatprep.subr.mxu0 %v66
  %297 = vmatpush2.msra.mxu0 %v65
  %298 = vmatprep.subr.mxu0 %v64
  %299 = vmatpush2.msra.mxu0 %v63
  %300 = vmatprep.subr.mxu0 %v62
  %301 = vmatpush2.msra.mxu0 %v61
  %302 = vmatprep.subr.mxu0 %v60
  %303 = vmatpush2.msra.mxu0 %v59
  %304 = vmatprep.subr.mxu0 %v58
  %305 = vmatpush2.msra.mxu0 %v57
  %306 = vmatprep.subr.mxu0 %v56
  %307 = vmatpush2.msra.mxu0 %v55
  %308 = vmatprep.subr.mxu0 %v54
  %309 = vmatpush2.msra.mxu0 %v53
  %310 = vmatprep.subr.mxu0 %v52
  %311 = vmatpush2.msra.mxu0 %v51
  %312 = vmatprep.mubr.f32.mxu0 %v241
  %313 = vmatmul.mubr.f32.gmra.mxu0 %v240
  %v314 = vpop.f32.mrf.mxu0
  %v315 = vadd.f32 0.0, %v314
  %v316 = vpop.f32.mrf.mxu0
  %v317 = vadd.f32 0.0, %v316
  %318 = vdwg.mxu0
  %v319 = vadd.f32 %v246, %v315
  %v320 = vadd.f32 %v247, %v317
  %v321 = vtanh.pop %v319
  %v322 = vtanh.pop %v320
  %s323 = scalar_lea.vmem %s2, 32
  %324 = vst [vmem:[%s323] sm:$0xff] %v321
  %325 = vst [vmem:[%s323 + $0x8] sm:$0xff] %v322
  %s326 = scalar_lea.vmem %s0, 48
  %v327 = vld [vmem:[%s326] sm:$0xff]
  %v328 = vld [vmem:[%s326 + $0x8] sm:$0xff]
  %329 = vmatprep.subr.mxu0 %v50
  %330 = vmatpush1.msra.mxu0 %v49
  %331 = vmatprep.subr.mxu0 %v48
  %332 = vmatpush1.msra.mxu0 %v47
  %333 = vmatprep.subr.mxu0 %v46
  %334 = vmatpush1.msra.mxu0 %v45
  %335 = vmatprep.subr.mxu0 %v44
  %336 = vmatpush1.msra.mxu0 %v43
  %337 = vmatprep.subr.mxu0 %v42
  %338 = vmatpush1.msra.mxu0 %v41
  %339 = vmatprep.subr.mxu0 %v40
  %340 = vmatpush1.msra.mxu0 %v39
  %341 = vmatprep.subr.mxu0 %v38
  %342 = vmatpush1.msra.mxu0 %v37
  %343 = vmatprep.subr.mxu0 %v36
  %344 = vmatpush1.msra.mxu0 %v35
  %345 = vmatprep.subr.mxu0 %v34
  %346 = vmatpush1.msra.mxu0 %v33
  %347 = vmatprep.subr.mxu0 %v32
  %348 = vmatpush1.msra.mxu0 %v31
  %349 = vmatprep.subr.mxu0 %v30
  %350 = vmatpush1.msra.mxu0 %v29
  %351 = vmatprep.subr.mxu0 %v28
  %352 = vmatpush1.msra.mxu0 %v27
  %353 = vmatprep.subr.mxu0 %v26
  %354 = vmatpush1.msra.mxu0 %v25
  %355 = vmatprep.subr.mxu0 %v24
  %356 = vmatpush1.msra.mxu0 %v23
  %357 = vmatprep.subr.mxu0 %v22
  %358 = vmatpush1.msra.mxu0 %v21
  %359 = vmatprep.subr.mxu0 %v20
  %360 = vmatpush1.msra.mxu0 %v19
  %361 = vmatprep.subr.mxu0 %v82
  %362 = vmatpush2.msra.mxu0 %v81
  %363 = vmatprep.subr.mxu0 %v80
  %364 = vmatpush2.msra.mxu0 %v79
  %365 = vmatprep.subr.mxu0 %v78
  %366 = vmatpush2.msra.mxu0 %v77
  %367 = vmatprep.subr.mxu0 %v76
  %368 = vmatpush2.msra.mxu0 %v75
  %369 = vmatprep.subr.mxu0 %v74
  %370 = vmatpush2.msra.mxu0 %v73
  %371 = vmatprep.subr.mxu0 %v72
  %372 = vmatpush2.msra.mxu0 %v71
  %373 = vmatprep.subr.mxu0 %v70
  %374 = vmatpush2.msra.mxu0 %v69
  %375 = vmatprep.subr.mxu0 %v68
  %376 = vmatpush2.msra.mxu0 %v67
  %377 = vmatprep.subr.mxu0 %v66
  %378 = vmatpush2.msra.mxu0 %v65
  %379 = vmatprep.subr.mxu0 %v64
  %380 = vmatpush2.msra.mxu0 %v63
  %381 = vmatprep.subr.mxu0 %v62
  %382 = vmatpush2.msra.mxu0 %v61
  %383 = vmatprep.subr.mxu0 %v60
  %384 = vmatpush2.msra.mxu0 %v59
  %385 = vmatprep.subr.mxu0 %v58
  %386 = vmatpush2.msra.mxu0 %v57
  %387 = vmatprep.subr.mxu0 %v56
  %388 = vmatpush2.msra.mxu0 %v55
  %389 = vmatprep.subr.mxu0 %v54
  %390 = vmatpush2.msra.mxu0 %v53
  %391 = vmatprep.subr.mxu0 %v52
  %392 = vmatpush2.msra.mxu0 %v51
  %393 = vmatprep.mubr.f32.mxu0 %v322
  %394 = vmatmul.mubr.f32.gmra.mxu0 %v321
  %v395 = vpop.f32.mrf.mxu0
  %v396 = vadd.f32 0.0, %v395
  %v397 = vpop.f32.mrf.mxu0
  %v398 = vadd.f32 0.0, %v397
  %399 = vdwg.mxu0
  %v400 = vadd.f32 %v327, %v396
  %v401 = vadd.f32 %v328, %v398
  %v402 = vtanh.pop %v400
  %v403 = vtanh.pop %v401
  %s404 = scalar_lea.vmem %s2, 48
  %405 = vst [vmem:[%s404] sm:$0xff] %v402
  %406 = vst [vmem:[%s404 + $0x8] sm:$0xff] %v403
  %s407 = scalar_lea.vmem %s0, 64
  %v408 = vld [vmem:[%s407] sm:$0xff]
  %v409 = vld [vmem:[%s407 + $0x8] sm:$0xff]
  %410 = vmatprep.subr.mxu0 %v50
  %411 = vmatpush1.msra.mxu0 %v49
  %412 = vmatprep.subr.mxu0 %v48
  %413 = vmatpush1.msra.mxu0 %v47
  %414 = vmatprep.subr.mxu0 %v46
  %415 = vmatpush1.msra.mxu0 %v45
  %416 = vmatprep.subr.mxu0 %v44
  %417 = vmatpush1.msra.mxu0 %v43
  %418 = vmatprep.subr.mxu0 %v42
  %419 = vmatpush1.msra.mxu0 %v41
  %420 = vmatprep.subr.mxu0 %v40
  %421 = vmatpush1.msra.mxu0 %v39
  %422 = vmatprep.subr.mxu0 %v38
  %423 = vmatpush1.msra.mxu0 %v37
  %424 = vmatprep.subr.mxu0 %v36
  %425 = vmatpush1.msra.mxu0 %v35
  %426 = vmatprep.subr.mxu0 %v34
  %427 = vmatpush1.msra.mxu0 %v33
  %428 = vmatprep.subr.mxu0 %v32
  %429 = vmatpush1.msra.mxu0 %v31
  %430 = vmatprep.subr.mxu0 %v30
  %431 = vmatpush1.msra.mxu0 %v29
  %432 = vmatprep.subr.mxu0 %v28
  %433 = vmatpush1.msra.mxu0 %v27
  %434 = vmatprep.subr.mxu0 %v26
  %435 = vmatpush1.msra.mxu0 %v25
  %436 = vmatprep.subr.mxu0 %v24
  %437 = vmatpush1.msra.mxu0 %v23
  %438 = vmatprep.subr.mxu0 %v22
  %439 = vmatpush1.msra.mxu0 %v21
  %440 = vmatprep.subr.mxu0 %v20
  %441 = vmatpush1.msra.mxu0 %v19
  %442 = vmatprep.subr.mxu0 %v82
  %443 = vmatpush2.msra.mxu0 %v81
  %444 = vmatprep.subr.mxu0 %v80
  %445 = vmatpush2.msra.mxu0 %v79
  %446 = vmatprep.subr.mxu0 %v78
  %447 = vmatpush2.msra.mxu0 %v77
  %448 = vmatprep.subr.mxu0 %v76
  %449 = vmatpush2.msra.mxu0 %v75
  %450 = vmatprep.subr.mxu0 %v74
  %451 = vmatpush2.msra.mxu0 %v73
  %452 = vmatprep.subr.mxu0 %v72
  %453 = vmatpush2.msra.mxu0 %v71
  %454 = vmatprep.subr.mxu0 %v70
  %455 = vmatpush2.msra.mxu0 %v69
  %456 = vmatprep.subr.mxu0 %v68
  %457 = vmatpush2.msra.mxu0 %v67
  %458 = vmatprep.subr.mxu0 %v66
  %459 = vmatpush2.msra.mxu0 %v65
  %460 = vmatprep.subr.mxu0 %v64
  %461 = vmatpush2.msra.mxu0 %v63
  %462 = vmatprep.subr.mxu0 %v62
  %463 = vmatpush2.msra.mxu0 %v61
  %464 = vmatprep.subr.mxu0 %v60
  %465 = vmatpush2.msra.mxu0 %v59
  %466 = vmatprep.subr.mxu0 %v58
  %467 = vmatpush2.msra.mxu0 %v57
  %468 = vmatprep.subr.mxu0 %v56
  %469 = vmatpush2.msra.mxu0 %v55
  %470 = vmatprep.subr.mxu0 %v54
  %471 = vmatpush2.msra.mxu0 %v53
  %472 = vmatprep.subr.mxu0 %v52
  %473 = vmatpush2.msra.mxu0 %v51
  %474 = vmatprep.mubr.f32.mxu0 %v403
  %475 = vmatmul.mubr.f32.gmra.mxu0 %v402
  %v476 = vpop.f32.mrf.mxu0
  %v477 = vadd.f32 0.0, %v476
  %v478 = vpop.f32.mrf.mxu0
  %v479 = vadd.f32 0.0, %v478
  %480 = vdwg.mxu0
  %v481 = vadd.f32 %v408, %v477
  %v482 = vadd.f32 %v409, %v479
  %v483 = vtanh.pop %v481
  %v484 = vtanh.pop %v482
  %s485 = scalar_lea.vmem %s2, 64
  %486 = vst [vmem:[%s485] sm:$0xff] %v483
  %487 = vst [vmem:[%s485 + $0x8] sm:$0xff] %v484
  %s488 = scalar_lea.vmem %s0, 80
  %v489 = vld [vmem:[%s488] sm:$0xff]
  %v490 = vld [vmem:[%s488 + $0x8] sm:$0xff]
  %491 = vmatprep.subr.mxu0 %v50
  %492 = vmatpush1.msra.mxu0 %v49
  %493 = vmatprep.subr.mxu0 %v48
  %494 = vmatpush1.msra.mxu0 %v47
  %495 = vmatprep.subr.mxu0 %v46
  %496 = vmatpush1.msra.mxu0 %v45
  %497 = vmatprep.subr.mxu0 %v44
  %498 = vmatpush1.msra.mxu0 %v43
  %499 = vmatprep.subr.mxu0 %v42
  %500 = vmatpush1.msra.mxu0 %v41
  %501 = vmatprep.subr.mxu0 %v40
  %502 = vmatpush1.msra.mxu0 %v39
  %503 = vmatprep.subr.mxu0 %v38
  %504 = vmatpush1.msra.mxu0 %v37
  %505 = vmatprep.subr.mxu0 %v36
  %506 = vmatpush1.msra.mxu0 %v35
  %507 = vmatprep.subr.mxu0 %v34
  %508 = vmatpush1.msra.mxu0 %v33
  %509 = vmatprep.subr.mxu0 %v32
  %510 = vmatpush1.msra.mxu0 %v31
  %511 = vmatprep.subr.mxu0 %v30
  %512 = vmatpush1.msra.mxu0 %v29
  %513 = vmatprep.subr.mxu0 %v28
  %514 = vmatpush1.msra.mxu0 %v27
  %515 = vmatprep.subr.mxu0 %v26
  %516 = vmatpush1.msra.mxu0 %v25
  %517 = vmatprep.subr.mxu0 %v24
  %518 = vmatpush1.msra.mxu0 %v23
  %519 = vmatprep.subr.mxu0 %v22
  %520 = vmatpush1.msra.mxu0 %v21
  %521 = vmatprep.subr.mxu0 %v20
  %522 = vmatpush1.msra.mxu0 %v19
  %523 = vmatprep.subr.mxu0 %v82
  %524 = vmatpush2.msra.mxu0 %v81
  %525 = vmatprep.subr.mxu0 %v80
  %526 = vmatpush2.msra.mxu0 %v79
  %527 = vmatprep.subr.mxu0 %v78
  %528 = vmatpush2.msra.mxu0 %v77
  %529 = vmatprep.subr.mxu0 %v76
  %530 = vmatpush2.msra.mxu0 %v75
  %531 = vmatprep.subr.mxu0 %v74
  %532 = vmatpush2.msra.mxu0 %v73
  %533 = vmatprep.subr.mxu0 %v72
  %534 = vmatpush2.msra.mxu0 %v71
  %535 = vmatprep.subr.mxu0 %v70
  %536 = vmatpush2.msra.mxu0 %v69
  %537 = vmatprep.subr.mxu0 %v68
  %538 = vmatpush2.msra.mxu0 %v67
  %539 = vmatprep.subr.mxu0 %v66
  %540 = vmatpush2.msra.mxu0 %v65
  %541 = vmatprep.subr.mxu0 %v64
  %542 = vmatpush2.msra.mxu0 %v63
  %543 = vmatprep.subr.mxu0 %v62
  %544 = vmatpush2.msra.mxu0 %v61
  %545 = vmatprep.subr.mxu0 %v60
  %546 = vmatpush2.msra.mxu0 %v59
  %547 = vmatprep.subr.mxu0 %v58
  %548 = vmatpush2.msra.mxu0 %v57
  %549 = vmatprep.subr.mxu0 %v56
  %550 = vmatpush2.msra.mxu0 %v55
  %551 = vmatprep.subr.mxu0 %v54
  %552 = vmatpush2.msra.mxu0 %v53
  %553 = vmatprep.subr.mxu0 %v52
  %554 = vmatpush2.msra.mxu0 %v51
  %555 = vmatprep.mubr.f32.mxu0 %v484
  %556 = vmatmul.mubr.f32.gmra.mxu0 %v483
  %v557 = vpop.f32.mrf.mxu0
  %v558 = vadd.f32 0.0, %v557
  %v559 = vpop.f32.mrf.mxu0
  %v560 = vadd.f32 0.0, %v559
  %561 = vdwg.mxu0
  %v562 = vadd.f32 %v489, %v558
  %v563 = vadd.f32 %v490, %v560
  %v564 = vtanh.pop %v562
  %v565 = vtanh.pop %v563
  %s566 = scalar_lea.vmem %s2, 80
  %567 = vst [vmem:[%s566] sm:$0xff] %v564
  %568 = vst [vmem:[%s566 + $0x8] sm:$0xff] %v565
  %s569 = scalar_lea.vmem %s0, 96
  %v570 = vld [vmem:[%s569] sm:$0xff]
  %v571 = vld [vmem:[%s569 + $0x8] sm:$0xff]
  %572 = vmatprep.subr.mxu0 %v50
  %573 = vmatpush1.msra.mxu0 %v49
  %574 = vmatprep.subr.mxu0 %v48
  %575 = vmatpush1.msra.mxu0 %v47
  %576 = vmatprep.subr.mxu0 %v46
  %577 = vmatpush1.msra.mxu0 %v45
  %578 = vmatprep.subr.mxu0 %v44
  %579 = vmatpush1.msra.mxu0 %v43
  %580 = vmatprep.subr.mxu0 %v42
  %581 = vmatpush1.msra.mxu0 %v41
  %582 = vmatprep.subr.mxu0 %v40
  %583 = vmatpush1.msra.mxu0 %v39
  %584 = vmatprep.subr.mxu0 %v38
  %585 = vmatpush1.msra.mxu0 %v37
  %586 = vmatprep.subr.mxu0 %v36
  %587 = vmatpush1.msra.mxu0 %v35
  %588 = vmatprep.subr.mxu0 %v34
  %589 = vmatpush1.msra.mxu0 %v33
  %590 = vmatprep.subr.mxu0 %v32
  %591 = vmatpush1.msra.mxu0 %v31
  %592 = vmatprep.subr.mxu0 %v30
  %593 = vmatpush1.msra.mxu0 %v29
  %594 = vmatprep.subr.mxu0 %v28
  %595 = vmatpush1.msra.mxu0 %v27
  %596 = vmatprep.subr.mxu0 %v26
  %597 = vmatpush1.msra.mxu0 %v25
  %598 = vmatprep.subr.mxu0 %v24
  %599 = vmatpush1.msra.mxu0 %v23
  %600 = vmatprep.subr.mxu0 %v22
  %601 = vmatpush1.msra.mxu0 %v21
  %602 = vmatprep.subr.mxu0 %v20
  %603 = vmatpush1.msra.mxu0 %v19
  %604 = vmatprep.subr.mxu0 %v82
  %605 = vmatpush2.msra.mxu0 %v81
  %606 = vmatprep.subr.mxu0 %v80
  %607 = vmatpush2.msra.mxu0 %v79
  %608 = vmatprep.subr.mxu0 %v78
  %609 = vmatpush2.msra.mxu0 %v77
  %610 = vmatprep.subr.mxu0 %v76
  %611 = vmatpush2.msra.mxu0 %v75
  %612 = vmatprep.subr.mxu0 %v74
  %613 = vmatpush2.msra.mxu0 %v73
  %614 = vmatprep.subr.mxu0 %v72
  %615 = vmatpush2.msra.mxu0 %v71
  %616 = vmatprep.subr.mxu0 %v70
  %617 = vmatpush2.msra.mxu0 %v69
  %618 = vmatprep.subr.mxu0 %v68
  %619 = vmatpush2.msra.mxu0 %v67
  %620 = vmatprep.subr.mxu0 %v66
  %621 = vmatpush2.msra.mxu0 %v65
  %622 = vmatprep.subr.mxu0 %v64
  %623 = vmatpush2.msra.mxu0 %v63
  %624 = vmatprep.subr.mxu0 %v62
  %625 = vmatpush2.msra.mxu0 %v61
  %626 = vmatprep.subr.mxu0 %v60
  %627 = vmatpush2.msra.mxu0 %v59
  %628 = vmatprep.subr.mxu0 %v58
  %629 = vmatpush2.msra.mxu0 %v57
  %630 = vmatprep.subr.mxu0 %v56
  %631 = vmatpush2.msra.mxu0 %v55
  %632 = vmatprep.subr.mxu0 %v54
  %633 = vmatpush2.msra.mxu0 %v53
  %634 = vmatprep.subr.mxu0 %v52
  %635 = vmatpush2.msra.mxu0 %v51
  %636 = vmatprep.mubr.f32.mxu0 %v565
  %637 = vmatmul.mubr.f32.gmra.mxu0 %v564
  %v638 = vpop.f32.mrf.mxu0
  %v639 = vadd.f32 0.0, %v638
  %v640 = vpop.f32.mrf.mxu0
  %v641 = vadd.f32 0.0, %v640
  %642 = vdwg.mxu0
  %v643 = vadd.f32 %v570, %v639
  %v644 = vadd.f32 %v571, %v641
  %v645 = vtanh.pop %v643
  %v646 = vtanh.pop %v644
  %s647 = scalar_lea.vmem %s2, 96
  %648 = vst [vmem:[%s647] sm:$0xff] %v645
  %649 = vst [vmem:[%s647 + $0x8] sm:$0xff] %v646
  %s650 = scalar_lea.vmem %s0, 112
  %v651 = vld [vmem:[%s650] sm:$0xff]
  %v652 = vld [vmem:[%s650 + $0x8] sm:$0xff]
  %653 = vmatprep.subr.mxu0 %v50
  %654 = vmatpush1.msra.mxu0 %v49
  %655 = vmatprep.subr.mxu0 %v48
  %656 = vmatpush1.msra.mxu0 %v47
  %657 = vmatprep.subr.mxu0 %v46
  %658 = vmatpush1.msra.mxu0 %v45
  %659 = vmatprep.subr.mxu0 %v44
  %660 = vmatpush1.msra.mxu0 %v43
  %661 = vmatprep.subr.mxu0 %v42
  %662 = vmatpush1.msra.mxu0 %v41
  %663 = vmatprep.subr.mxu0 %v40
  %664 = vmatpush1.msra.mxu0 %v39
  %665 = vmatprep.subr.mxu0 %v38
  %666 = vmatpush1.msra.mxu0 %v37
  %667 = vmatprep.subr.mxu0 %v36
  %668 = vmatpush1.msra.mxu0 %v35
  %669 = vmatprep.subr.mxu0 %v34
  %670 = vmatpush1.msra.mxu0 %v33
  %671 = vmatprep.subr.mxu0 %v32
  %672 = vmatpush1.msra.mxu0 %v31
  %673 = vmatprep.subr.mxu0 %v30
  %674 = vmatpush1.msra.mxu0 %v29
  %675 = vmatprep.subr.mxu0 %v28
  %676 = vmatpush1.msra.mxu0 %v27
  %677 = vmatprep.subr.mxu0 %v26
  %678 = vmatpush1.msra.mxu0 %v25
  %679 = vmatprep.subr.mxu0 %v24
  %680 = vmatpush1.msra.mxu0 %v23
  %681 = vmatprep.subr.mxu0 %v22
  %682 = vmatpush1.msra.mxu0 %v21
  %683 = vmatprep.subr.mxu0 %v20
  %684 = vmatpush1.msra.mxu0 %v19
  %685 = vmatprep.subr.mxu0 %v82
  %686 = vmatpush2.msra.mxu0 %v81
  %687 = vmatprep.subr.mxu0 %v80
  %688 = vmatpush2.msra.mxu0 %v79
  %689 = vmatprep.subr.mxu0 %v78
  %690 = vmatpush2.msra.mxu0 %v77
  %691 = vmatprep.subr.mxu0 %v76
  %692 = vmatpush2.msra.mxu0 %v75
  %693 = vmatprep.subr.mxu0 %v74
  %694 = vmatpush2.msra.mxu0 %v73
  %695 = vmatprep.subr.mxu0 %v72
  %696 = vmatpush2.msra.mxu0 %v71
  %697 = vmatprep.subr.mxu0 %v70
  %698 = vmatpush2.msra.mxu0 %v69
  %699 = vmatprep.subr.mxu0 %v68
  %700 = vmatpush2.msra.mxu0 %v67
  %701 = vmatprep.subr.mxu0 %v66
  %702 = vmatpush2.msra.mxu0 %v65
  %703 = vmatprep.subr.mxu0 %v64
  %704 = vmatpush2.msra.mxu0 %v63
  %705 = vmatprep.subr.mxu0 %v62
  %706 = vmatpush2.msra.mxu0 %v61
  %707 = vmatprep.subr.mxu0 %v60
  %708 = vmatpush2.msra.mxu0 %v59
  %709 = vmatprep.subr.mxu0 %v58
  %710 = vmatpush2.msra.mxu0 %v57
  %711 = vmatprep.subr.mxu0 %v56
  %712 = vmatpush2.msra.mxu0 %v55
  %713 = vmatprep.subr.mxu0 %v54
  %714 = vmatpush2.msra.mxu0 %v53
  %715 = vmatprep.subr.mxu0 %v52
  %716 = vmatpush2.msra.mxu0 %v51
  %717 = vmatprep.mubr.f32.mxu0 %v646
  %718 = vmatmul.mubr.f32.gmra.mxu0 %v645
  %v719 = vpop.f32.mrf.mxu0
  %v720 = vadd.f32 0.0, %v719
  %v721 = vpop.f32.mrf.mxu0
  %v722 = vadd.f32 0.0, %v721
  %723 = vdwg.mxu0
  %v724 = vadd.f32 %v651, %v720
  %v725 = vadd.f32 %v652, %v722
  %v726 = vtanh.pop %v724
  %v727 = vtanh.pop %v725
  %s728 = scalar_lea.vmem %s2, 112
  %729 = vst [vmem:[%s728] sm:$0xff] %v726
  %730 = vst [vmem:[%s728 + $0x8] sm:$0xff] %v727
  %731 = vst [vmem:[#allocation2] sm:$0xff] %v726
  %732 = vst [vmem:[#allocation2 + $0x8] sm:$0xff] %v727
  // Predicated region
  $region14: #{rnn_lm_forward.4} parent=0 // pred_check
    %p733 = pneg %p13
  $region15: #{rnn_lm_forward.4} parent=0 // pred_check_branch
    %735 = sbr.rel (%p733) target = $region17
  $region16: #{rnn_lm_forward.4} parent=0 // pred_region
    %736 = vst [vmem:[%s3] sm:$0xff] %v726
    %737 = vst [vmem:[%s3 + $0x8] sm:$0xff] %v727
  $region17: #{rnn_lm_forward.4} parent=0 // pred_fallthru
    _
  // Predicated region
  $region18: #{rnn_lm_forward.4} parent=0 // pred_check
    _
  $region19: #{rnn_lm_forward.4} parent=0 // pred_check_branch
    %739 = sbr.rel (0) target = $region21
  $region20: #{rnn_lm_forward.4} parent=0 // pred_region
    _
  $region21: #{rnn_lm_forward.4} parent=0 // pred_fallthru
    _
  // Predicated region
  $region22: #{rnn_lm_forward.4} parent=0 // pred_check
    _
  $region23: #{rnn_lm_forward.4} parent=0 // pred_check_branch
    %741 = sbr.rel (0) target = $region25
  $region24: #{rnn_lm_forward.4} parent=0 // pred_region
    _
  $region25: #{rnn_lm_forward.4} parent=0 // pred_fallthru
    _
  // Predicated region
  $region26: #{rnn_lm_forward.4} parent=0 // pred_check
    _
  $region27: #{rnn_lm_forward.4} parent=0 // pred_check_branch
    %743 = sbr.rel (0) target = $region29
  $region28: #{rnn_lm_forward.4} parent=0 // pred_region
    _
  $region29: #{rnn_lm_forward.4} parent=0 // pred_fallthru
    _
  // Predicated region
  $region30: #{rnn_lm_forward.4} parent=0 // pred_check
    _
  $region31: #{rnn_lm_forward.4} parent=0 // pred_check_branch
    %745 = sbr.rel (0) target = $region33
  $region32: #{rnn_lm_forward.4} parent=0 // pred_region
    _
  $region33: #{rnn_lm_forward.4} parent=0 // pred_fallthru
    _

</llo_original>
